<compile_context>
chip_gen: v6e
topology: v6e:2x2x1
jax: 0.10.0
libtpu: 0.0.40
codegen_flags: <defaults>
</compile_context>

<pallas_src>
import functools

import jax
import jax.numpy as jnp
from jax.experimental import pallas as pl
from jax.experimental.pallas import tpu as pltpu

LOG_CLAMP_MAG = 100.0     # nn.BCELoss clamps its log terms at -100
COS_EPS = 1e-8            # nn.CosineSimilarity default eps
_SUB = 512                # lane sub-chunk width (keeps temporaries in vregs)
_VMEM_LIMIT = 32 * 1024 * 1024


# ----------------------------------------------------------------------------
# Tiling helpers
# ----------------------------------------------------------------------------
def _lane_tile(n, cap=4096):
    """Largest multiple-of-128 divisor of n that is <= cap, else full n."""
    if n <= cap:
        return n
    if n % 128 != 0:
        # TODO(synk): awkward N falls back to one full-width tile; a cdiv grid
        # with a masked tail would pipeline this case too.
        return n
    t = (cap // 128) * 128
    while t >= 128:
        if n % t == 0:
            return t
        t -= 128
    return n


def _batch_tile(b):
    # Multiples of 8 keep dense (8,128) sublane tiling.  Prefer >= 2 batch
    # blocks so the "parallel" axis can shard across v7x's two TensorCores.
    if b % 8 == 0 and b >= 16:
        return 8
    return b


def _col_slices(width, lane):
    return [slice(j * lane, (j + 1) * lane) for j in range(width // lane)]


def _fold(v, lane, op):
    """Combine 128-wide column groups of (bt, k*lane) -> (bt, lane) with op (VPU)."""
    sls = _col_slices(v.shape[-1], lane)
    acc = v[:, sls[0]]
    for sl in sls[1:]:
        acc = op(acc, v[:, sl])
    return acc


def _channel_specs(num_c, bt, nt, nblk):
    # One dense 2-D (bt, nt) block per channel out of the free (B, C*N) view.
    return [pl.BlockSpec((bt, nt), (lambda b, n, _c=c, _k=nblk: (b, _c * _k + n)))
            for c in range(num_c)]


def _head_chunk(ch_refs, wb_ref, sl):
    """Lane-dense 1x1-conv head on a column sub-chunk: pure VPU FMAs."""
    num_c = len(ch_refs)
    y = ch_refs[0][:, sl].astype(jnp.float32) * wb_ref[0]
    for c in range(1, num_c):
        y = y + ch_refs[c][:, sl].astype(jnp.float32) * wb_ref[c]
    return y + wb_ref[num_c]


# ----------------------------------------------------------------------------
# Kernel 1: pointwise (1x1-conv) head — stand-in for the external student /
# teacher saliency nets (used by predict()).  Output is a lane-dense (B, N) map.
# ----------------------------------------------------------------------------
def _head_kernel(*refs, num_c, apply_sigmoid, sub):
    ch_refs = refs[:num_c]
    wb_ref = refs[num_c]
    o_ref = refs[num_c + 1]
    nt = o_ref.shape[-1]
    for off in range(0, nt, sub):
        sl = slice(off, off + sub)
        y = _head_chunk(ch_refs, wb_ref, sl)
        if apply_sigmoid:
            y = 0.5 * jnp.tanh(0.5 * y) + 0.5      # 1 EUP op, not exp + recip
        o_ref[:, sl] = y


def pointwise_head(x_flat, n_spatial, wb, *, apply_sigmoid, n_tile_cap=4096):
    B = x_flat.shape[0]
    num_c = x_flat.shape[1] // n_spatial
    bt = _batch_tile(B)
    nt = _lane_tile(n_spatial, n_tile_cap)
    nblk = n_spatial // nt
    sub = _SUB if nt % _SUB == 0 else nt
    in_specs = _channel_specs(num_c, bt, nt, nblk) + [
        pl.BlockSpec(memory_space=pltpu.MemorySpace.SMEM)]
    return pl.pallas_call(
        functools.partial(_head_kernel, num_c=num_c,
                          apply_sigmoid=apply_sigmoid, sub=sub),
        out_shape=jax.ShapeDtypeStruct((B, n_spatial), jnp.float32),
        grid=(B // bt, n_spatial // nt),
        in_specs=in_specs,
        out_specs=pl.BlockSpec((bt, nt), lambda b, n: (b, n)),
        compiler_params=pltpu.CompilerParams(
            dimension_semantics=("parallel", "parallel"),
            vmem_limit_bytes=_VMEM_LIMIT),
    )(*([x_flat] * num_c), wb)


# ----------------------------------------------------------------------------
# Kernel 2: fully fused SalGAN loss (heads + BCE / KL / cosine / normalized-BCE).
#
# Per-row BCE uses linearity in the target with the softplus identity:
#   -log(1 - sigmoid(s)) = softplus(s)  (clamped at 100 <-> nn.BCELoss -100 clamp)
#   diff = log(p) - log(1-p) = s   (exact outside the clamp regime |s| >~ 17,
#   where the f32-saturated PyTorch value would hit the clamp; see review note)
#   BCE(target t) row-sum = A - sum(t * s),  A = sum(clamped softplus(s))
# KL / cosine use per-lane flash-style online softmax stats; all cross-lane
# reductions, merges and divisions happen once per batch row in the finalize.
# ----------------------------------------------------------------------------
def _fused_loss_kernel(*refs, num_c, num_tc, use_teacher, use_gt, use_prob,
                       inv_b, inv_bn, sub, lane):
    it = iter(refs)
    sx = [next(it) for _ in range(num_c)]        # student channel tiles (bt, nt)
    sw = next(it)                                # (C+1,) SMEM weights + bias
    tx = tw = None
    if use_teacher:
        tx = [next(it) for _ in range(num_tc)]
        tw = next(it)
    g_ref = next(it) if (use_gt or use_prob) else None
    out_ref = next(it)                           # (bt, 1) per-row loss contribution
    # 13 lane-parallel (bt, lane) f32 running stats
    (a1, st, sg, ss, gmn, gmx, rm, rd, regt, re2, xls, gsm, g2) = it

    nk = pl.program_id(1)

    def fsum(v): return _fold(v, lane, jnp.add)
    def fmax(v): return _fold(v, lane, jnp.maximum)
    def fmin(v): return _fold(v, lane, jnp.minimum)

    @pl.when(nk == 0)
    def _init():
        zero = jnp.zeros(a1.shape, jnp.float32)
        for r in (a1, st, sg, ss, rd, regt, re2, xls, gsm, g2):
            r[...] = zero
        gmn[...] = jnp.full(gmn.shape, jnp.inf, jnp.float32)
        gmx[...] = jnp.full(gmx.shape, -jnp.inf, jnp.float32)
        rm[...] = jnp.full(rm.shape, -jnp.inf, jnp.float32)

    nt = sx[0].shape[-1]
    for off in range(0, nt, sub):                # 512-lane sub-chunks: temps fit vregs
        sl = slice(off, off + sub)
        s = _head_chunk(sx, sw, sl)              # student logits (bt, sub) f32
        # -log(1 - sigmoid(s)) = softplus(s): 2 EUP ops instead of 4
        sp = jnp.minimum(jnp.maximum(s, 0.0)
                         + jnp.log(1.0 + jnp.exp(-jnp.abs(s))), LOG_CLAMP_MAG)
        a1[...] += fsum(sp)

        if use_teacher:
            tch = 0.5 * jnp.tanh(0.5 * _head_chunk(tx, tw, sl)) + 0.5
            st[...] += fsum(tch * s)

        if use_gt or use_prob:
            g = g_ref[:, sl].astype(jnp.float32)
            sg[...] += fsum(g * s)

        if use_prob:
            ss[...] += fsum(s)
            gmn[...] = jnp.minimum(gmn[...], fmin(g))
            gmx[...] = jnp.maximum(gmx[...], fmax(g))
            gsm[...] += fsum(g)
            g2[...] += fsum(g * g)
            xls[...] += fsum(jnp.where(g > 0.0, g * jnp.log(g), 0.0))
            # per-lane online softmax stats (one rescale per sub-chunk)
            m_new = jnp.maximum(rm[...], fmax(s))
            alpha = jnp.exp(rm[...] - m_new)
            d = rd[...] * alpha
            eg = regt[...] * alpha
            # alpha**2 may underflow for large max jumps; this matches the true
            # underflow of exp(2*(s-m)) and is benign for the norm.
            e2 = re2[...] * (alpha * alpha)
            for csl in _col_slices(sub, lane):
                e = jnp.exp(s[:, csl] - m_new)
                d = d + e
                eg = eg + e * g[:, csl]
                e2 = e2 + e * e
            rm[...] = m_new
            rd[...] = d
            regt[...] = eg
            re2[...] = e2

    @pl.when(nk == pl.num_programs(1) - 1)
    def _finalize():
        def rsum(r): return jnp.sum(r[...], axis=1, keepdims=True)
        A = rsum(a1)                                         # -sum(log(1-p))
        tot = jnp.zeros(out_ref.shape, jnp.float32)
        if use_teacher:                                      # mean BCE vs teacher map
            tot = tot + inv_bn * (A - rsum(st))
        if use_gt:                                           # mean BCE vs ground truth
            tot = tot + inv_bn * (A - rsum(sg))
        if use_prob:
            # All divisions / sqrt / cross-lane merges live here (once per row).
            Sg = rsum(sg)
            Ss = rsum(ss)
            Gmn = jnp.min(gmn[...], axis=1, keepdims=True)
            Gmx = jnp.max(gmx[...], axis=1, keepdims=True)
            M = jnp.max(rm[...], axis=1, keepdims=True)
            w = jnp.exp(rm[...] - M)
            Z = jnp.sum(rd[...] * w, axis=1, keepdims=True)
            Rg = jnp.sum(regt[...] * w, axis=1, keepdims=True)
            R2 = jnp.sum(re2[...] * (w * w), axis=1, keepdims=True)
            logz = M + jnp.log(Z)                            # per-row log-sum-exp(s)
            kl_row = rsum(xls) - Sg + rsum(gsm) * logz
            dot = Rg / Z                                     # <softmax(s), gt>
            n1 = jnp.sqrt(R2) / Z                            # ||softmax(s)||
            n2 = jnp.sqrt(rsum(g2))                          # ||gt||
            cos = dot / (jnp.maximum(n1, COS_EPS) * jnp.maximum(n2, COS_EPS))
            # TODO(synk): no eps on (gmax - gmin), mirroring the PyTorch reference
            # (a constant ground-truth row produces NaN there too).
            bce_norm = A - (Sg - Gmn * Ss) / (Gmx - Gmn)
            tot = (tot + 0.5 * inv_b * kl_row
                   + 0.3 * inv_bn * bce_norm
                   + 0.2 * inv_b * (1.0 - cos))
        out_ref[...] = tot


def fused_salgan_loss(student_flat, student_wb, teacher_flat, teacher_wb,
                      gt_flat, *, n_spatial, use_teacher, use_gt, use_prob,
                      n_tile_cap=4096):
    if not (use_teacher or use_gt or use_prob):
        return jnp.zeros((), jnp.float32)
    B = student_flat.shape[0]
    num_c = student_flat.shape[1] // n_spatial
    bt = _batch_tile(B)
    nt = _lane_tile(n_spatial, n_tile_cap)
    nblk = n_spatial // nt
    sub = _SUB if nt % _SUB == 0 else nt
    lane = 128 if nt % 128 == 0 else nt

    arrays = [student_flat] * num_c + [student_wb]
    in_specs = _channel_specs(num_c, bt, nt, nblk) + [
        pl.BlockSpec(memory_space=pltpu.MemorySpace.SMEM)]
    num_tc = 0
    if use_teacher:
        # teacher saliency map must match the student map's spatial size
        num_tc = teacher_flat.shape[1] // n_spatial
        arrays += [teacher_flat] * num_tc + [teacher_wb]
        in_specs += _channel_specs(num_tc, bt, nt, nblk) + [
            pl.BlockSpec(memory_space=pltpu.MemorySpace.SMEM)]
    if use_gt or use_prob:
        arrays += [gt_flat]
        in_specs += [pl.BlockSpec((bt, nt), lambda b, n: (b, n))]

    kernel = functools.partial(
        _fused_loss_kernel, num_c=num_c, num_tc=num_tc, use_teacher=use_teacher,
        use_gt=use_gt, use_prob=use_prob, inv_b=1.0 / B,
        inv_bn=1.0 / (B * n_spatial), sub=sub, lane=lane)

    per_row = pl.pallas_call(
        kernel,
        out_shape=jax.ShapeDtypeStruct((B, 1), jnp.float32),
        grid=(B // bt, n_spatial // nt),
        in_specs=in_specs,
        out_specs=pl.BlockSpec((bt, 1), lambda b, n: (b, 0)),
        scratch_shapes=[pltpu.VMEM((bt, lane), jnp.float32) for _ in range(13)],
        compiler_params=pltpu.CompilerParams(
            dimension_semantics=("parallel", "arbitrary"),
            vmem_limit_bytes=_VMEM_LIMIT),
    )(*arrays)
    return jnp.sum(per_row)


# ----------------------------------------------------------------------------
# Kernel 3: per-layer squared-difference reduction for the pretrain hint loss.
# No concat / pad / weight stream: each layer is read exactly once and the
# 1/(B*N_l) MSE normalization is applied to the per-layer scalar.
# ----------------------------------------------------------------------------
def _sq_diff_kernel(s_ref, t_ref, o_ref, acc_ref, *, sub, lane):
    nk = pl.program_id(1)

    @pl.when(nk == 0)
    def _():
        acc_ref[...] = jnp.zeros(acc_ref.shape, jnp.float32)

    nt = s_ref.shape[-1]
    for off in range(0, nt, sub):
        sl = slice(off, off + sub)
        d = s_ref[:, sl].astype(jnp.float32) - t_ref[:, sl].astype(jnp.float32)
        acc_ref[...] += _fold(d * d, lane, jnp.add)

    @pl.when(nk == pl.num_programs(1) - 1)
    def _():
        o_ref[...] = jnp.sum(acc_ref[...], axis=1, keepdims=True)


def layer_sq_diff_sum(s2, t2, *, n_tile_cap=4096):
    B, n_l = s2.shape
    bt = _batch_tile(B)
    nt = _lane_tile(n_l, n_tile_cap)
    sub = _SUB if nt % _SUB == 0 else nt
    lane = 128 if nt % 128 == 0 else nt
    per_row = pl.pallas_call(
        functools.partial(_sq_diff_kernel, sub=sub, lane=lane),
        out_shape=jax.ShapeDtypeStruct((B, 1), jnp.float32),
        grid=(B // bt, n_l // nt),
        in_specs=[pl.BlockSpec((bt, nt), lambda b, n: (b, n)),
                  pl.BlockSpec((bt, nt), lambda b, n: (b, n))],
        out_specs=pl.BlockSpec((bt, 1), lambda b, n: (b, 0)),
        scratch_shapes=[pltpu.VMEM((bt, lane), jnp.float32)],
        compiler_params=pltpu.CompilerParams(
            dimension_semantics=("parallel", "arbitrary"),
            vmem_limit_bytes=_VMEM_LIMIT),
    )(s2, t2)
    return jnp.sum(per_row)


def compute_hint_loss_l_pallas(student_d, teacher_d, batch_size, layers,
                               normalize=False):
    per_layer = []
    for count, (s_d, t_d) in enumerate(zip(student_d, teacher_d)):
        if count not in layers:
            continue
        s2 = s_d.reshape(batch_size, -1)     # free views
        t2 = t_d.reshape(batch_size, -1)
        mse_l = layer_sq_diff_sum(s2, t2) / float(batch_size * s2.shape[1])
        per_layer.append(1.0 - mse_l if normalize else mse_l)
    if not per_layer:
        return jnp.zeros((), jnp.float32)
    return sum(per_layer)


# ----------------------------------------------------------------------------
# Module wrapper mirroring salgan_teacher_student
# ----------------------------------------------------------------------------
class SalganTeacherStudentPallas:
    def __init__(self, pretrain_mode, model_type, use_gt=False, use_teacher=False,
                 use_pseudo_gt=False, use_probability_gt=False, c_in=3):
        if pretrain_mode:
            use_teacher = True
        self.pretrain_mode = pretrain_mode
        self.model_type = model_type
        self.use_teacher = use_teacher
        self.use_gt = use_gt
        self.use_pseudo_gt = use_pseudo_gt
        self.use_probability_gt = use_probability_gt
        self.training = True
        self.c_in = c_in

        # TODO(synk): the fastsal student net and SalGAN VGG16 teacher are external
        # modules not included in the provided source; they are replaced by
        # deterministic 1x1-conv stand-in heads producing (B,1,H,W) saliency maps.
        def head_params(seed):
            kw, kb = jax.random.split(jax.random.PRNGKey(seed))
            w = jax.random.normal(kw, (c_in,), jnp.float32) * 0.5
            b = jax.random.normal(kb, (1,), jnp.float32) * 0.1
            return jnp.concatenate([w, b])          # (C+1,): weights then bias

        self.wb_student = head_params(1)
        self.wb_teacher = head_params(2)

    def forward(self, inputs, vgg_inputs, targets=None, n_tile_cap=4096):
        B, C, H, W = vgg_inputs.shape
        N = H * W
        sal_target = None
        if targets is not None:
            sal_target = targets[0] if isinstance(targets, (list, tuple)) else targets

        use_teacher_term = self.use_teacher and (
            (self.training and self.use_gt) or (not self.use_gt))
        if self.pretrain_mode:
            # TODO(synk): the pretrain branch consumes the external nets' decoder
            # feature lists; call compute_pretrain_loss(student_d, teacher_d, B)
            # directly for that path.
            use_teacher_term = False
        use_gt_term = self.use_gt
        use_prob_term = self.use_pseudo_gt and self.use_probability_gt

        student_flat = vgg_inputs.reshape(B, C * N)               # free NCHW view
        teacher_flat = (inputs.reshape(inputs.shape[0], -1)
                        if use_teacher_term else None)
        gt_flat = (sal_target.reshape(B, N)
                   if (use_gt_term or use_prob_term) else None)

        return fused_salgan_loss(
            student_flat, self.wb_student, teacher_flat, self.wb_teacher,
            gt_flat, n_spatial=N, use_teacher=use_teacher_term,
            use_gt=use_gt_term, use_prob=use_prob_term, n_tile_cap=n_tile_cap)

    def predict(self, inputs):
        B, C, H, W = inputs.shape
        salmap = pointwise_head(inputs.reshape(B, C * H * W), H * W,
                                self.wb_student,
                                apply_sigmoid=not self.use_probability_gt)
        return salmap.reshape(B, 1, H, W)

    def compute_pretrain_loss(self, student_d, teacher_d, batch_size):
        if self.model_type == 'C':
            return compute_hint_loss_l_pallas(student_d, teacher_d[::-1],
                                              batch_size, [0, 1, 2, 3])
        raise SystemExit()


# ----------------------------------------------------------------------------
# Pure-JAX reference (mirrors PyTorch semantics) for verification
# ----------------------------------------------------------------------------
def _ref_loss(model, inputs, vgg_inputs, sal_target, *, use_teacher, use_gt, use_prob):
    B, C, H, W = vgg_inputs.shape
    N = H * W

    def head(x, wb):
        xr = x.reshape(x.shape[0], x.shape[1], -1).astype(jnp.float32)
        return jnp.einsum('bcn,c->bn', xr, wb[:-1]) + wb[-1]

    s = head(vgg_inputs, model.wb_student)
    p = jax.nn.sigmoid(s)
    lp = jnp.maximum(jnp.log(p), -LOG_CLAMP_MAG)
    l1 = jnp.maximum(jnp.log(1.0 - p), -LOG_CLAMP_MAG)

    def bce(tt):
        return jnp.mean(-(tt * lp + (1.0 - tt) * l1))

    total = jnp.zeros((), jnp.float32)
    if use_teacher:
        t_sal = jax.nn.sigmoid(head(inputs, model.wb_teacher))
        total += bce(t_sal)
    g = None
    if use_gt or use_prob:
        g = sal_target.reshape(B, N).astype(jnp.float32)
    if use_gt:
        total += bce(g)
    if use_prob:
        gmin = g.min(1, keepdims=True)
        gmax = g.max(1, keepdims=True)
        gn = (g - gmin) / (gmax - gmin)
        logsm = jax.nn.log_softmax(s, axis=1)
        sm = jax.nn.softmax(s, axis=1)
        kl = jnp.sum(jnp.where(g > 0, g * jnp.log(g), 0.0) - g * logsm) / B
        cos = jnp.sum(sm * g, 1) / (
            jnp.maximum(jnp.linalg.norm(sm, axis=1), COS_EPS) *
            jnp.maximum(jnp.linalg.norm(g, axis=1), COS_EPS))
        cc = 1.0 - jnp.mean(cos)
        total += 0.5 * kl + 0.3 * bce(gn) + 0.2 * cc
    return total


if __name__ == "__main__":
    key = jax.random.PRNGKey(0)
    k1, k2, k3, k4 = jax.random.split(key, 4)

    B, C, H, W = 2, 3, 32, 32
    # activations streamed in bf16 (cast to f32 in-kernel); gt stays f32
    inputs = jax.random.normal(k1, (B, C, H, W), jnp.float32).astype(jnp.bfloat16)
    vgg_inputs = jax.random.normal(k2, (B, C, H, W), jnp.float32).astype(jnp.bfloat16)
    sal_target = jax.random.uniform(k3, (B, 1, H, W), jnp.float32,
                                    minval=1e-3, maxval=1.0 - 1e-3)

    # --- config 1: teacher-BCE + gt-BCE + 3-loss probability head ---
    model = SalganTeacherStudentPallas(pretrain_mode=False, model_type='C',
                                       use_gt=True, use_teacher=True,
                                       use_pseudo_gt=True, use_probability_gt=True)
    loss = jax.block_until_ready(model.forward(inputs, vgg_inputs,
                                               targets=[sal_target]))
    ref = _ref_loss(model, inputs, vgg_inputs, sal_target,
                    use_teacher=True, use_gt=True, use_prob=True)
    assert jnp.allclose(loss, ref, rtol=5e-4, atol=1e-4), (loss, ref)

    # --- config 1b: same flags, small tiles -> multi-step grid accumulation ---
    loss_small = jax.block_until_ready(model.forward(inputs, vgg_inputs,
                                                     targets=[sal_target],
                                                     n_tile_cap=256))
    assert jnp.allclose(loss_small, ref, rtol=5e-4, atol=1e-4), (loss_small, ref)

    # --- config 2: teacher-only BCE (no ground-truth tensor is DMA'd at all) ---
    model_t = SalganTeacherStudentPallas(pretrain_mode=False, model_type='C',
                                         use_gt=False, use_teacher=True)
    loss_t = jax.block_until_ready(model_t.forward(inputs, vgg_inputs))
    ref_t = _ref_loss(model_t, inputs, vgg_inputs, None,
                      use_teacher=True, use_gt=False, use_prob=False)
    assert jnp.allclose(loss_t, ref_t, rtol=5e-4, atol=1e-4), (loss_t, ref_t)

    # --- config 3: probability-gt-only 3-loss head (no teacher input DMA'd) ---
    model_p = SalganTeacherStudentPallas(pretrain_mode=False, model_type='C',
                                         use_gt=False, use_teacher=False,
                                         use_pseudo_gt=True, use_probability_gt=True)
    loss_p = jax.block_until_ready(model_p.forward(inputs, vgg_inputs,
                                                   targets=sal_target))
    ref_p = _ref_loss(model_p, inputs, vgg_inputs, sal_target,
                      use_teacher=False, use_gt=False, use_prob=True)
    assert jnp.allclose(loss_p, ref_p, rtol=5e-4, atol=1e-4), (loss_p, ref_p)

    # --- predict(): standalone lane-dense pointwise head kernel ---
    pred = jax.block_until_ready(model.predict(vgg_inputs))        # raw logits
    pred_ref = (jnp.einsum('bchw,c->bhw', vgg_inputs.astype(jnp.float32),
                           model.wb_student[:-1])
                + model.wb_student[-1]).reshape(B, 1, H, W)
    assert jnp.allclose(pred, pred_ref, rtol=1e-4, atol=1e-4), (pred, pred_ref)

    pred_s = jax.block_until_ready(model_t.predict(vgg_inputs))    # sigmoid path
    assert jnp.allclose(pred_s, jax.nn.sigmoid(pred_ref), rtol=1e-4, atol=1e-4)

    # --- pretrain branch: per-layer hint MSE over stand-in decoder features ---
    model_pre = SalganTeacherStudentPallas(pretrain_mode=True, model_type='C')
    feat_shapes = [(B, 8, 16, 16), (B, 16, 8, 8), (B, 32, 4, 4), (B, 64, 2, 2)]
    keys = jax.random.split(k4, 8)
    student_d = [jax.random.normal(keys[i], s, jnp.float32)
                 for i, s in enumerate(feat_shapes)]
    # teacher_d is consumed reversed inside compute_pretrain_loss
    teacher_d = [jax.random.normal(keys[4 + i], s, jnp.float32)
                 for i, s in enumerate(reversed(feat_shapes))]
    loss_pre = jax.block_until_ready(
        model_pre.compute_pretrain_loss(student_d, teacher_d, B))
    ref_pre = sum(jnp.mean((s.reshape(B, -1) - t.reshape(B, -1)) ** 2)
                  for s, t in zip(student_d, teacher_d[::-1]))
    assert jnp.allclose(loss_pre, ref_pre, rtol=1e-4, atol=1e-4), (loss_pre, ref_pre)

    print("KERNEL_OK")
</pallas_src>

<mosaic_0001>
module attributes {stable_mosaic.version = 11 : i64} {
  func.func @_fused_loss_kernel(%arg0: i32, %arg1: i32, %arg2: memref<2x1024xbf16, #tpu.memory_space<vmem>>, %arg3: memref<2x1024xbf16, #tpu.memory_space<vmem>>, %arg4: memref<2x1024xbf16, #tpu.memory_space<vmem>>, %arg5: memref<4xf32, #tpu.memory_space<smem>>, %arg6: memref<2x1024xbf16, #tpu.memory_space<vmem>>, %arg7: memref<2x1024xbf16, #tpu.memory_space<vmem>>, %arg8: memref<2x1024xbf16, #tpu.memory_space<vmem>>, %arg9: memref<4xf32, #tpu.memory_space<smem>>, %arg10: memref<2x1024xf32, #tpu.memory_space<vmem>>, %arg11: memref<2x1xf32, #tpu.memory_space<vmem>>, %arg12: memref<2x128xf32, #tpu.memory_space<vmem>>, %arg13: memref<2x128xf32, #tpu.memory_space<vmem>>, %arg14: memref<2x128xf32, #tpu.memory_space<vmem>>, %arg15: memref<2x128xf32, #tpu.memory_space<vmem>>, %arg16: memref<2x128xf32, #tpu.memory_space<vmem>>, %arg17: memref<2x128xf32, #tpu.memory_space<vmem>>, %arg18: memref<2x128xf32, #tpu.memory_space<vmem>>, %arg19: memref<2x128xf32, #tpu.memory_space<vmem>>, %arg20: memref<2x128xf32, #tpu.memory_space<vmem>>, %arg21: memref<2x128xf32, #tpu.memory_space<vmem>>, %arg22: memref<2x128xf32, #tpu.memory_space<vmem>>, %arg23: memref<2x128xf32, #tpu.memory_space<vmem>>, %arg24: memref<2x128xf32, #tpu.memory_space<vmem>>) attributes {dimension_semantics = [#tpu.dimension_semantics<parallel>, #tpu.dimension_semantics<arbitrary>], iteration_bounds = array<i64: 1, 1>, scalar_prefetch = 0 : i64, scratch_operands = 13 : i64, tpu.core_type = #tpu.core_type<tc>, window_params = [{transform_indices = @transform_0, window_bounds = array<i64: 2, 1024>}, {transform_indices = @transform_1, window_bounds = array<i64: 2, 1024>}, {transform_indices = @transform_2, window_bounds = array<i64: 2, 1024>}, {transform_indices = @transform_3, window_bounds = array<i64: 4>}, {transform_indices = @transform_4, window_bounds = array<i64: 2, 1024>}, {transform_indices = @transform_5, window_bounds = array<i64: 2, 1024>}, {transform_indices = @transform_6, window_bounds = array<i64: 2, 1024>}, {transform_indices = @transform_7, window_bounds = array<i64: 4>}, {transform_indices = @transform_8, window_bounds = array<i64: 2, 1024>}, {transform_indices = @transform_9, window_bounds = array<i64: 2, 1>}]} {
    %c0_i32 = arith.constant 0 : i32
    %0 = arith.cmpi eq, %arg1, %c0_i32 : i32
    %1 = arith.extui %0 : i1 to i32
    %c0_i32_0 = arith.constant 0 : i32
    %2 = arith.cmpi ne, %1, %c0_i32_0 : i32
    scf.if %2 {
      %cst_167 = arith.constant 0.000000e+00 : f32
      %442 = vector.broadcast %cst_167 : f32 to vector<2x128xf32>
      %c0_168 = arith.constant 0 : index
      %c0_169 = arith.constant 0 : index
      %443 = vector.load %arg12[%c0_168, %c0_169] : memref<2x128xf32, #tpu.memory_space<vmem>>, vector<2x128xf32>
      tpu.vector_store %arg12[%c0_168, %c0_169], %442 {strides = array<i32>} : memref<2x128xf32, #tpu.memory_space<vmem>>, vector<2x128xf32>,
      %c0_170 = arith.constant 0 : index
      %c0_171 = arith.constant 0 : index
      %444 = vector.load %arg13[%c0_170, %c0_171] : memref<2x128xf32, #tpu.memory_space<vmem>>, vector<2x128xf32>
      tpu.vector_store %arg13[%c0_170, %c0_171], %442 {strides = array<i32>} : memref<2x128xf32, #tpu.memory_space<vmem>>, vector<2x128xf32>,
      %c0_172 = arith.constant 0 : index
      %c0_173 = arith.constant 0 : index
      %445 = vector.load %arg14[%c0_172, %c0_173] : memref<2x128xf32, #tpu.memory_space<vmem>>, vector<2x128xf32>
      tpu.vector_store %arg14[%c0_172, %c0_173], %442 {strides = array<i32>} : memref<2x128xf32, #tpu.memory_space<vmem>>, vector<2x128xf32>,
      %c0_174 = arith.constant 0 : index
      %c0_175 = arith.constant 0 : index
      %446 = vector.load %arg15[%c0_174, %c0_175] : memref<2x128xf32, #tpu.memory_space<vmem>>, vector<2x128xf32>
      tpu.vector_store %arg15[%c0_174, %c0_175], %442 {strides = array<i32>} : memref<2x128xf32, #tpu.memory_space<vmem>>, vector<2x128xf32>,
      %c0_176 = arith.constant 0 : index
      %c0_177 = arith.constant 0 : index
      %447 = vector.load %arg19[%c0_176, %c0_177] : memref<2x128xf32, #tpu.memory_space<vmem>>, vector<2x128xf32>
      tpu.vector_store %arg19[%c0_176, %c0_177], %442 {strides = array<i32>} : memref<2x128xf32, #tpu.memory_space<vmem>>, vector<2x128xf32>,
      %c0_178 = arith.constant 0 : index
      %c0_179 = arith.constant 0 : index
      %448 = vector.load %arg20[%c0_178, %c0_179] : memref<2x128xf32, #tpu.memory_space<vmem>>, vector<2x128xf32>
      tpu.vector_store %arg20[%c0_178, %c0_179], %442 {strides = array<i32>} : memref<2x128xf32, #tpu.memory_space<vmem>>, vector<2x128xf32>,
      %c0_180 = arith.constant 0 : index
      %c0_181 = arith.constant 0 : index
      %449 = vector.load %arg21[%c0_180, %c0_181] : memref<2x128xf32, #tpu.memory_space<vmem>>, vector<2x128xf32>
      tpu.vector_store %arg21[%c0_180, %c0_181], %442 {strides = array<i32>} : memref<2x128xf32, #tpu.memory_space<vmem>>, vector<2x128xf32>,
      %c0_182 = arith.constant 0 : index
      %c0_183 = arith.constant 0 : index
      %450 = vector.load %arg22[%c0_182, %c0_183] : memref<2x128xf32, #tpu.memory_space<vmem>>, vector<2x128xf32>
      tpu.vector_store %arg22[%c0_182, %c0_183], %442 {strides = array<i32>} : memref<2x128xf32, #tpu.memory_space<vmem>>, vector<2x128xf32>,
      %c0_184 = arith.constant 0 : index
      %c0_185 = arith.constant 0 : index
      %451 = vector.load %arg23[%c0_184, %c0_185] : memref<2x128xf32, #tpu.memory_space<vmem>>, vector<2x128xf32>
      tpu.vector_store %arg23[%c0_184, %c0_185], %442 {strides = array<i32>} : memref<2x128xf32, #tpu.memory_space<vmem>>, vector<2x128xf32>,
      %c0_186 = arith.constant 0 : index
      %c0_187 = arith.constant 0 : index
      %452 = vector.load %arg24[%c0_186, %c0_187] : memref<2x128xf32, #tpu.memory_space<vmem>>, vector<2x128xf32>
      tpu.vector_store %arg24[%c0_186, %c0_187], %442 {strides = array<i32>} : memref<2x128xf32, #tpu.memory_space<vmem>>, vector<2x128xf32>,
      %cst_188 = arith.constant 0x7F800000 : f32
      %453 = vector.broadcast %cst_188 : f32 to vector<2x128xf32>
      %c0_189 = arith.constant 0 : index
      %c0_190 = arith.constant 0 : index
      %454 = vector.load %arg16[%c0_189, %c0_190] : memref<2x128xf32, #tpu.memory_space<vmem>>, vector<2x128xf32>
      tpu.vector_store %arg16[%c0_189, %c0_190], %453 {strides = array<i32>} : memref<2x128xf32, #tpu.memory_space<vmem>>, vector<2x128xf32>,
      %cst_191 = arith.constant 0xFF800000 : f32
      %455 = vector.broadcast %cst_191 : f32 to vector<2x128xf32>
      %c0_192 = arith.constant 0 : index
      %c0_193 = arith.constant 0 : index
      %456 = vector.load %arg17[%c0_192, %c0_193] : memref<2x128xf32, #tpu.memory_space<vmem>>, vector<2x128xf32>
      tpu.vector_store %arg17[%c0_192, %c0_193], %455 {strides = array<i32>} : memref<2x128xf32, #tpu.memory_space<vmem>>, vector<2x128xf32>,
      %cst_194 = arith.constant 0xFF800000 : f32
      %457 = vector.broadcast %cst_194 : f32 to vector<2x128xf32>
      %c0_195 = arith.constant 0 : index
      %c0_196 = arith.constant 0 : index
      %458 = vector.load %arg18[%c0_195, %c0_196] : memref<2x128xf32, #tpu.memory_space<vmem>>, vector<2x128xf32>
      tpu.vector_store %arg18[%c0_195, %c0_196], %457 {strides = array<i32>} : memref<2x128xf32, #tpu.memory_space<vmem>>, vector<2x128xf32>,
    } else {
    }
    %c0 = arith.constant 0 : index
    %c0_1 = arith.constant 0 : index
    %3 = vector.load %arg2[%c0, %c0_1] : memref<2x1024xbf16, #tpu.memory_space<vmem>>, vector<2x512xbf16>
    %4 = arith.extf %3 : vector<2x512xbf16> to vector<2x512xf32>
    %c0_2 = arith.constant 0 : index
    %5 = memref.load %arg5[%c0_2] : memref<4xf32, #tpu.memory_space<smem>>
    %6 = vector.broadcast %5 : f32 to vector<2x512xf32>
    %7 = arith.mulf %4, %6 : vector<2x512xf32>
    %c0_3 = arith.constant 0 : index
    %c0_4 = arith.constant 0 : index
    %8 = vector.load %arg3[%c0_3, %c0_4] : memref<2x1024xbf16, #tpu.memory_space<vmem>>, vector<2x512xbf16>
    %9 = arith.extf %8 : vector<2x512xbf16> to vector<2x512xf32>
    %c1 = arith.constant 1 : index
    %10 = memref.load %arg5[%c1] : memref<4xf32, #tpu.memory_space<smem>>
    %11 = vector.broadcast %10 : f32 to vector<2x512xf32>
    %12 = arith.mulf %9, %11 : vector<2x512xf32>
    %13 = arith.addf %7, %12 : vector<2x512xf32>
    %c0_5 = arith.constant 0 : index
    %c0_6 = arith.constant 0 : index
    %14 = vector.load %arg4[%c0_5, %c0_6] : memref<2x1024xbf16, #tpu.memory_space<vmem>>, vector<2x512xbf16>
    %15 = arith.extf %14 : vector<2x512xbf16> to vector<2x512xf32>
    %c2 = arith.constant 2 : index
    %16 = memref.load %arg5[%c2] : memref<4xf32, #tpu.memory_space<smem>>
    %17 = vector.broadcast %16 : f32 to vector<2x512xf32>
    %18 = arith.mulf %15, %17 : vector<2x512xf32>
    %19 = arith.addf %13, %18 : vector<2x512xf32>
    %c3 = arith.constant 3 : index
    %20 = memref.load %arg5[%c3] : memref<4xf32, #tpu.memory_space<smem>>
    %21 = vector.broadcast %20 : f32 to vector<2x512xf32>
    %22 = arith.addf %19, %21 : vector<2x512xf32>
    %cst = arith.constant 0.000000e+00 : f32
    %23 = vector.broadcast %cst : f32 to vector<2x512xf32>
    %24 = arith.maximumf %22, %23 : vector<2x512xf32>
    %25 = math.absf %22 : vector<2x512xf32>
    %cst_7 = arith.constant 0.000000e+00 : f32
    %26 = vector.broadcast %cst_7 : f32 to vector<2x512xf32>
    %27 = arith.subf %26, %25 : vector<2x512xf32>
    %28 = math.exp %27 : vector<2x512xf32>
    %cst_8 = arith.constant 1.000000e+00 : f32
    %29 = vector.broadcast %cst_8 : f32 to vector<2x512xf32>
    %30 = arith.addf %29, %28 : vector<2x512xf32>
    %31 = math.log %30 : vector<2x512xf32>
    %32 = arith.addf %24, %31 : vector<2x512xf32>
    %cst_9 = arith.constant 1.000000e+02 : f32
    %33 = vector.broadcast %cst_9 : f32 to vector<2x512xf32>
    %34 = arith.minimumf %32, %33 : vector<2x512xf32>
    %c0_10 = arith.constant 0 : index
    %c0_11 = arith.constant 0 : index
    %35 = vector.load %arg12[%c0_10, %c0_11] : memref<2x128xf32, #tpu.memory_space<vmem>>, vector<2x128xf32>
    %36 = vector.extract_strided_slice %34 {offsets = [0, 0], sizes = [2, 128], strides = [1, 1]} : vector<2x512xf32> to vector<2x128xf32>
    %37 = vector.extract_strided_slice %34 {offsets = [0, 128], sizes = [2, 128], strides = [1, 1]} : vector<2x512xf32> to vector<2x128xf32>
    %38 = arith.addf %36, %37 : vector<2x128xf32>
    %39 = vector.extract_strided_slice %34 {offsets = [0, 256], sizes = [2, 128], strides = [1, 1]} : vector<2x512xf32> to vector<2x128xf32>
    %40 = arith.addf %38, %39 : vector<2x128xf32>
    %41 = vector.extract_strided_slice %34 {offsets = [0, 384], sizes = [2, 128], strides = [1, 1]} : vector<2x512xf32> to vector<2x128xf32>
    %42 = arith.addf %40, %41 : vector<2x128xf32>
    %43 = arith.addf %35, %42 : vector<2x128xf32>
    %c0_12 = arith.constant 0 : index
    %c0_13 = arith.constant 0 : index
    %44 = vector.load %arg12[%c0_12, %c0_13] : memref<2x128xf32, #tpu.memory_space<vmem>>, vector<2x128xf32>
    tpu.vector_store %arg12[%c0_12, %c0_13], %43 {strides = array<i32>} : memref<2x128xf32, #tpu.memory_space<vmem>>, vector<2x128xf32>,
    %c0_14 = arith.constant 0 : index
    %c0_15 = arith.constant 0 : index
    %45 = vector.load %arg6[%c0_14, %c0_15] : memref<2x1024xbf16, #tpu.memory_space<vmem>>, vector<2x512xbf16>
    %46 = arith.extf %45 : vector<2x512xbf16> to vector<2x512xf32>
    %c0_16 = arith.constant 0 : index
    %47 = memref.load %arg9[%c0_16] : memref<4xf32, #tpu.memory_space<smem>>
    %48 = vector.broadcast %47 : f32 to vector<2x512xf32>
    %49 = arith.mulf %46, %48 : vector<2x512xf32>
    %c0_17 = arith.constant 0 : index
    %c0_18 = arith.constant 0 : index
    %50 = vector.load %arg7[%c0_17, %c0_18] : memref<2x1024xbf16, #tpu.memory_space<vmem>>, vector<2x512xbf16>
    %51 = arith.extf %50 : vector<2x512xbf16> to vector<2x512xf32>
    %c1_19 = arith.constant 1 : index
    %52 = memref.load %arg9[%c1_19] : memref<4xf32, #tpu.memory_space<smem>>
    %53 = vector.broadcast %52 : f32 to vector<2x512xf32>
    %54 = arith.mulf %51, %53 : vector<2x512xf32>
    %55 = arith.addf %49, %54 : vector<2x512xf32>
    %c0_20 = arith.constant 0 : index
    %c0_21 = arith.constant 0 : index
    %56 = vector.load %arg8[%c0_20, %c0_21] : memref<2x1024xbf16, #tpu.memory_space<vmem>>, vector<2x512xbf16>
    %57 = arith.extf %56 : vector<2x512xbf16> to vector<2x512xf32>
    %c2_22 = arith.constant 2 : index
    %58 = memref.load %arg9[%c2_22] : memref<4xf32, #tpu.memory_space<smem>>
    %59 = vector.broadcast %58 : f32 to vector<2x512xf32>
    %60 = arith.mulf %57, %59 : vector<2x512xf32>
    %61 = arith.addf %55, %60 : vector<2x512xf32>
    %c3_23 = arith.constant 3 : index
    %62 = memref.load %arg9[%c3_23] : memref<4xf32, #tpu.memory_space<smem>>
    %63 = vector.broadcast %62 : f32 to vector<2x512xf32>
    %64 = arith.addf %61, %63 : vector<2x512xf32>
    %cst_24 = arith.constant 5.000000e-01 : f32
    %65 = vector.broadcast %cst_24 : f32 to vector<2x512xf32>
    %66 = arith.mulf %65, %64 : vector<2x512xf32>
    %67 = math.tanh %66 : vector<2x512xf32>
    %cst_25 = arith.constant 5.000000e-01 : f32
    %68 = vector.broadcast %cst_25 : f32 to vector<2x512xf32>
    %69 = arith.mulf %68, %67 : vector<2x512xf32>
    %cst_26 = arith.constant 5.000000e-01 : f32
    %70 = vector.broadcast %cst_26 : f32 to vector<2x512xf32>
    %71 = arith.addf %69, %70 : vector<2x512xf32>
    %c0_27 = arith.constant 0 : index
    %c0_28 = arith.constant 0 : index
    %72 = vector.load %arg13[%c0_27, %c0_28] : memref<2x128xf32, #tpu.memory_space<vmem>>, vector<2x128xf32>
    %73 = arith.mulf %71, %22 : vector<2x512xf32>
    %74 = vector.extract_strided_slice %73 {offsets = [0, 0], sizes = [2, 128], strides = [1, 1]} : vector<2x512xf32> to vector<2x128xf32>
    %75 = vector.extract_strided_slice %73 {offsets = [0, 128], sizes = [2, 128], strides = [1, 1]} : vector<2x512xf32> to vector<2x128xf32>
    %76 = arith.addf %74, %75 : vector<2x128xf32>
    %77 = vector.extract_strided_slice %73 {offsets = [0, 256], sizes = [2, 128], strides = [1, 1]} : vector<2x512xf32> to vector<2x128xf32>
    %78 = arith.addf %76, %77 : vector<2x128xf32>
    %79 = vector.extract_strided_slice %73 {offsets = [0, 384], sizes = [2, 128], strides = [1, 1]} : vector<2x512xf32> to vector<2x128xf32>
    %80 = arith.addf %78, %79 : vector<2x128xf32>
    %81 = arith.addf %72, %80 : vector<2x128xf32>
    %c0_29 = arith.constant 0 : index
    %c0_30 = arith.constant 0 : index
    %82 = vector.load %arg13[%c0_29, %c0_30] : memref<2x128xf32, #tpu.memory_space<vmem>>, vector<2x128xf32>
    tpu.vector_store %arg13[%c0_29, %c0_30], %81 {strides = array<i32>} : memref<2x128xf32, #tpu.memory_space<vmem>>, vector<2x128xf32>,
    %c0_31 = arith.constant 0 : index
    %c0_32 = arith.constant 0 : index
    %83 = vector.load %arg10[%c0_31, %c0_32] : memref<2x1024xf32, #tpu.memory_space<vmem>>, vector<2x512xf32>
    %c0_33 = arith.constant 0 : index
    %c0_34 = arith.constant 0 : index
    %84 = vector.load %arg14[%c0_33, %c0_34] : memref<2x128xf32, #tpu.memory_space<vmem>>, vector<2x128xf32>
    %85 = arith.mulf %83, %22 : vector<2x512xf32>
    %86 = vector.extract_strided_slice %85 {offsets = [0, 0], sizes = [2, 128], strides = [1, 1]} : vector<2x512xf32> to vector<2x128xf32>
    %87 = vector.extract_strided_slice %85 {offsets = [0, 128], sizes = [2, 128], strides = [1, 1]} : vector<2x512xf32> to vector<2x128xf32>
    %88 = arith.addf %86, %87 : vector<2x128xf32>
    %89 = vector.extract_strided_slice %85 {offsets = [0, 256], sizes = [2, 128], strides = [1, 1]} : vector<2x512xf32> to vector<2x128xf32>
    %90 = arith.addf %88, %89 : vector<2x128xf32>
    %91 = vector.extract_strided_slice %85 {offsets = [0, 384], sizes = [2, 128], strides = [1, 1]} : vector<2x512xf32> to vector<2x128xf32>
    %92 = arith.addf %90, %91 : vector<2x128xf32>
    %93 = arith.addf %84, %92 : vector<2x128xf32>
    %c0_35 = arith.constant 0 : index
    %c0_36 = arith.constant 0 : index
    %94 = vector.load %arg14[%c0_35, %c0_36] : memref<2x128xf32, #tpu.memory_space<vmem>>, vector<2x128xf32>
    tpu.vector_store %arg14[%c0_35, %c0_36], %93 {strides = array<i32>} : memref<2x128xf32, #tpu.memory_space<vmem>>, vector<2x128xf32>,
    %c0_37 = arith.constant 0 : index
    %c0_38 = arith.constant 0 : index
    %95 = vector.load %arg15[%c0_37, %c0_38] : memref<2x128xf32, #tpu.memory_space<vmem>>, vector<2x128xf32>
    %96 = vector.extract_strided_slice %22 {offsets = [0, 0], sizes = [2, 128], strides = [1, 1]} : vector<2x512xf32> to vector<2x128xf32>
    %97 = vector.extract_strided_slice %22 {offsets = [0, 128], sizes = [2, 128], strides = [1, 1]} : vector<2x512xf32> to vector<2x128xf32>
    %98 = arith.addf %96, %97 : vector<2x128xf32>
    %99 = vector.extract_strided_slice %22 {offsets = [0, 256], sizes = [2, 128], strides = [1, 1]} : vector<2x512xf32> to vector<2x128xf32>
    %100 = arith.addf %98, %99 : vector<2x128xf32>
    %101 = vector.extract_strided_slice %22 {offsets = [0, 384], sizes = [2, 128], strides = [1, 1]} : vector<2x512xf32> to vector<2x128xf32>
    %102 = arith.addf %100, %101 : vector<2x128xf32>
    %103 = arith.addf %95, %102 : vector<2x128xf32>
    %c0_39 = arith.constant 0 : index
    %c0_40 = arith.constant 0 : index
    %104 = vector.load %arg15[%c0_39, %c0_40] : memref<2x128xf32, #tpu.memory_space<vmem>>, vector<2x128xf32>
    tpu.vector_store %arg15[%c0_39, %c0_40], %103 {strides = array<i32>} : memref<2x128xf32, #tpu.memory_space<vmem>>, vector<2x128xf32>,
    %c0_41 = arith.constant 0 : index
    %c0_42 = arith.constant 0 : index
    %105 = vector.load %arg16[%c0_41, %c0_42] : memref<2x128xf32, #tpu.memory_space<vmem>>, vector<2x128xf32>
    %106 = vector.extract_strided_slice %83 {offsets = [0, 0], sizes = [2, 128], strides = [1, 1]} : vector<2x512xf32> to vector<2x128xf32>
    %107 = vector.extract_strided_slice %83 {offsets = [0, 128], sizes = [2, 128], strides = [1, 1]} : vector<2x512xf32> to vector<2x128xf32>
    %108 = arith.minimumf %106, %107 : vector<2x128xf32>
    %109 = vector.extract_strided_slice %83 {offsets = [0, 256], sizes = [2, 128], strides = [1, 1]} : vector<2x512xf32> to vector<2x128xf32>
    %110 = arith.minimumf %108, %109 : vector<2x128xf32>
    %111 = vector.extract_strided_slice %83 {offsets = [0, 384], sizes = [2, 128], strides = [1, 1]} : vector<2x512xf32> to vector<2x128xf32>
    %112 = arith.minimumf %110, %111 : vector<2x128xf32>
    %113 = arith.minimumf %105, %112 : vector<2x128xf32>
    %c0_43 = arith.constant 0 : index
    %c0_44 = arith.constant 0 : index
    %114 = vector.load %arg16[%c0_43, %c0_44] : memref<2x128xf32, #tpu.memory_space<vmem>>, vector<2x128xf32>
    tpu.vector_store %arg16[%c0_43, %c0_44], %113 {strides = array<i32>} : memref<2x128xf32, #tpu.memory_space<vmem>>, vector<2x128xf32>,
    %c0_45 = arith.constant 0 : index
    %c0_46 = arith.constant 0 : index
    %115 = vector.load %arg17[%c0_45, %c0_46] : memref<2x128xf32, #tpu.memory_space<vmem>>, vector<2x128xf32>
    %116 = vector.extract_strided_slice %83 {offsets = [0, 0], sizes = [2, 128], strides = [1, 1]} : vector<2x512xf32> to vector<2x128xf32>
    %117 = vector.extract_strided_slice %83 {offsets = [0, 128], sizes = [2, 128], strides = [1, 1]} : vector<2x512xf32> to vector<2x128xf32>
    %118 = arith.maximumf %116, %117 : vector<2x128xf32>
    %119 = vector.extract_strided_slice %83 {offsets = [0, 256], sizes = [2, 128], strides = [1, 1]} : vector<2x512xf32> to vector<2x128xf32>
    %120 = arith.maximumf %118, %119 : vector<2x128xf32>
    %121 = vector.extract_strided_slice %83 {offsets = [0, 384], sizes = [2, 128], strides = [1, 1]} : vector<2x512xf32> to vector<2x128xf32>
    %122 = arith.maximumf %120, %121 : vector<2x128xf32>
    %123 = arith.maximumf %115, %122 : vector<2x128xf32>
    %c0_47 = arith.constant 0 : index
    %c0_48 = arith.constant 0 : index
    %124 = vector.load %arg17[%c0_47, %c0_48] : memref<2x128xf32, #tpu.memory_space<vmem>>, vector<2x128xf32>
    tpu.vector_store %arg17[%c0_47, %c0_48], %123 {strides = array<i32>} : memref<2x128xf32, #tpu.memory_space<vmem>>, vector<2x128xf32>,
    %c0_49 = arith.constant 0 : index
    %c0_50 = arith.constant 0 : index
    %125 = vector.load %arg23[%c0_49, %c0_50] : memref<2x128xf32, #tpu.memory_space<vmem>>, vector<2x128xf32>
    %126 = vector.extract_strided_slice %83 {offsets = [0, 0], sizes = [2, 128], strides = [1, 1]} : vector<2x512xf32> to vector<2x128xf32>
    %127 = vector.extract_strided_slice %83 {offsets = [0, 128], sizes = [2, 128], strides = [1, 1]} : vector<2x512xf32> to vector<2x128xf32>
    %128 = arith.addf %126, %127 : vector<2x128xf32>
    %129 = vector.extract_strided_slice %83 {offsets = [0, 256], sizes = [2, 128], strides = [1, 1]} : vector<2x512xf32> to vector<2x128xf32>
    %130 = arith.addf %128, %129 : vector<2x128xf32>
    %131 = vector.extract_strided_slice %83 {offsets = [0, 384], sizes = [2, 128], strides = [1, 1]} : vector<2x512xf32> to vector<2x128xf32>
    %132 = arith.addf %130, %131 : vector<2x128xf32>
    %133 = arith.addf %125, %132 : vector<2x128xf32>
    %c0_51 = arith.constant 0 : index
    %c0_52 = arith.constant 0 : index
    %134 = vector.load %arg23[%c0_51, %c0_52] : memref<2x128xf32, #tpu.memory_space<vmem>>, vector<2x128xf32>
    tpu.vector_store %arg23[%c0_51, %c0_52], %133 {strides = array<i32>} : memref<2x128xf32, #tpu.memory_space<vmem>>, vector<2x128xf32>,
    %c0_53 = arith.constant 0 : index
    %c0_54 = arith.constant 0 : index
    %135 = vector.load %arg24[%c0_53, %c0_54] : memref<2x128xf32, #tpu.memory_space<vmem>>, vector<2x128xf32>
    %136 = arith.mulf %83, %83 : vector<2x512xf32>
    %137 = vector.extract_strided_slice %136 {offsets = [0, 0], sizes = [2, 128], strides = [1, 1]} : vector<2x512xf32> to vector<2x128xf32>
    %138 = vector.extract_strided_slice %136 {offsets = [0, 128], sizes = [2, 128], strides = [1, 1]} : vector<2x512xf32> to vector<2x128xf32>
    %139 = arith.addf %137, %138 : vector<2x128xf32>
    %140 = vector.extract_strided_slice %136 {offsets = [0, 256], sizes = [2, 128], strides = [1, 1]} : vector<2x512xf32> to vector<2x128xf32>
    %141 = arith.addf %139, %140 : vector<2x128xf32>
    %142 = vector.extract_strided_slice %136 {offsets = [0, 384], sizes = [2, 128], strides = [1, 1]} : vector<2x512xf32> to vector<2x128xf32>
    %143 = arith.addf %141, %142 : vector<2x128xf32>
    %144 = arith.addf %135, %143 : vector<2x128xf32>
    %c0_55 = arith.constant 0 : index
    %c0_56 = arith.constant 0 : index
    %145 = vector.load %arg24[%c0_55, %c0_56] : memref<2x128xf32, #tpu.memory_space<vmem>>, vector<2x128xf32>
    tpu.vector_store %arg24[%c0_55, %c0_56], %144 {strides = array<i32>} : memref<2x128xf32, #tpu.memory_space<vmem>>, vector<2x128xf32>,
    %c0_57 = arith.constant 0 : index
    %c0_58 = arith.constant 0 : index
    %146 = vector.load %arg22[%c0_57, %c0_58] : memref<2x128xf32, #tpu.memory_space<vmem>>, vector<2x128xf32>
    %cst_59 = arith.constant 0.000000e+00 : f32
    %147 = vector.broadcast %cst_59 : f32 to vector<2x512xf32>
    %148 = arith.cmpf ogt, %83, %147 : vector<2x512xf32>
    %149 = math.log %83 : vector<2x512xf32>
    %150 = arith.mulf %83, %149 : vector<2x512xf32>
    %cst_60 = arith.constant 0.000000e+00 : f32
    %151 = vector.broadcast %cst_60 : f32 to vector<2x512xf32>
    %152 = arith.select %148, %150, %151 : vector<2x512xi1>, vector<2x512xf32>
    %153 = vector.extract_strided_slice %152 {offsets = [0, 0], sizes = [2, 128], strides = [1, 1]} : vector<2x512xf32> to vector<2x128xf32>
    %154 = vector.extract_strided_slice %152 {offsets = [0, 128], sizes = [2, 128], strides = [1, 1]} : vector<2x512xf32> to vector<2x128xf32>
    %155 = arith.addf %153, %154 : vector<2x128xf32>
    %156 = vector.extract_strided_slice %152 {offsets = [0, 256], sizes = [2, 128], strides = [1, 1]} : vector<2x512xf32> to vector<2x128xf32>
    %157 = arith.addf %155, %156 : vector<2x128xf32>
    %158 = vector.extract_strided_slice %152 {offsets = [0, 384], sizes = [2, 128], strides = [1, 1]} : vector<2x512xf32> to vector<2x128xf32>
    %159 = arith.addf %157, %158 : vector<2x128xf32>
    %160 = arith.addf %146, %159 : vector<2x128xf32>
    %c0_61 = arith.constant 0 : index
    %c0_62 = arith.constant 0 : index
    %161 = vector.load %arg22[%c0_61, %c0_62] : memref<2x128xf32, #tpu.memory_space<vmem>>, vector<2x128xf32>
    tpu.vector_store %arg22[%c0_61, %c0_62], %160 {strides = array<i32>} : memref<2x128xf32, #tpu.memory_space<vmem>>, vector<2x128xf32>,
    %c0_63 = arith.constant 0 : index
    %c0_64 = arith.constant 0 : index
    %162 = vector.load %arg18[%c0_63, %c0_64] : memref<2x128xf32, #tpu.memory_space<vmem>>, vector<2x128xf32>
    %163 = vector.extract_strided_slice %22 {offsets = [0, 0], sizes = [2, 128], strides = [1, 1]} : vector<2x512xf32> to vector<2x128xf32>
    %164 = vector.extract_strided_slice %22 {offsets = [0, 128], sizes = [2, 128], strides = [1, 1]} : vector<2x512xf32> to vector<2x128xf32>
    %165 = arith.maximumf %163, %164 : vector<2x128xf32>
    %166 = vector.extract_strided_slice %22 {offsets = [0, 256], sizes = [2, 128], strides = [1, 1]} : vector<2x512xf32> to vector<2x128xf32>
    %167 = arith.maximumf %165, %166 : vector<2x128xf32>
    %168 = vector.extract_strided_slice %22 {offsets = [0, 384], sizes = [2, 128], strides = [1, 1]} : vector<2x512xf32> to vector<2x128xf32>
    %169 = arith.maximumf %167, %168 : vector<2x128xf32>
    %170 = arith.maximumf %162, %169 : vector<2x128xf32>
    %c0_65 = arith.constant 0 : index
    %c0_66 = arith.constant 0 : index
    %171 = vector.load %arg18[%c0_65, %c0_66] : memref<2x128xf32, #tpu.memory_space<vmem>>, vector<2x128xf32>
    %172 = arith.subf %171, %170 : vector<2x128xf32>
    %173 = math.exp %172 : vector<2x128xf32>
    %c0_67 = arith.constant 0 : index
    %c0_68 = arith.constant 0 : index
    %174 = vector.load %arg19[%c0_67, %c0_68] : memref<2x128xf32, #tpu.memory_space<vmem>>, vector<2x128xf32>
    %175 = arith.mulf %174, %173 : vector<2x128xf32>
    %c0_69 = arith.constant 0 : index
    %c0_70 = arith.constant 0 : index
    %176 = vector.load %arg20[%c0_69, %c0_70] : memref<2x128xf32, #tpu.memory_space<vmem>>, vector<2x128xf32>
    %177 = arith.mulf %176, %173 : vector<2x128xf32>
    %c0_71 = arith.constant 0 : index
    %c0_72 = arith.constant 0 : index
    %178 = vector.load %arg21[%c0_71, %c0_72] : memref<2x128xf32, #tpu.memory_space<vmem>>, vector<2x128xf32>
    %179 = arith.mulf %173, %173 : vector<2x128xf32>
    %180 = arith.mulf %178, %179 : vector<2x128xf32>
    %181 = vector.extract_strided_slice %22 {offsets = [0, 0], sizes = [2, 128], strides = [1, 1]} : vector<2x512xf32> to vector<2x128xf32>
    %182 = arith.subf %181, %170 : vector<2x128xf32>
    %183 = math.exp %182 : vector<2x128xf32>
    %184 = arith.addf %175, %183 : vector<2x128xf32>
    %185 = vector.extract_strided_slice %83 {offsets = [0, 0], sizes = [2, 128], strides = [1, 1]} : vector<2x512xf32> to vector<2x128xf32>
    %186 = arith.mulf %183, %185 : vector<2x128xf32>
    %187 = arith.addf %177, %186 : vector<2x128xf32>
    %188 = arith.mulf %183, %183 : vector<2x128xf32>
    %189 = arith.addf %180, %188 : vector<2x128xf32>
    %190 = vector.extract_strided_slice %22 {offsets = [0, 128], sizes = [2, 128], strides = [1, 1]} : vector<2x512xf32> to vector<2x128xf32>
    %191 = arith.subf %190, %170 : vector<2x128xf32>
    %192 = math.exp %191 : vector<2x128xf32>
    %193 = arith.addf %184, %192 : vector<2x128xf32>
    %194 = vector.extract_strided_slice %83 {offsets = [0, 128], sizes = [2, 128], strides = [1, 1]} : vector<2x512xf32> to vector<2x128xf32>
    %195 = arith.mulf %192, %194 : vector<2x128xf32>
    %196 = arith.addf %187, %195 : vector<2x128xf32>
    %197 = arith.mulf %192, %192 : vector<2x128xf32>
    %198 = arith.addf %189, %197 : vector<2x128xf32>
    %199 = vector.extract_strided_slice %22 {offsets = [0, 256], sizes = [2, 128], strides = [1, 1]} : vector<2x512xf32> to vector<2x128xf32>
    %200 = arith.subf %199, %170 : vector<2x128xf32>
    %201 = math.exp %200 : vector<2x128xf32>
    %202 = arith.addf %193, %201 : vector<2x128xf32>
    %203 = vector.extract_strided_slice %83 {offsets = [0, 256], sizes = [2, 128], strides = [1, 1]} : vector<2x512xf32> to vector<2x128xf32>
    %204 = arith.mulf %201, %203 : vector<2x128xf32>
    %205 = arith.addf %196, %204 : vector<2x128xf32>
    %206 = arith.mulf %201, %201 : vector<2x128xf32>
    %207 = arith.addf %198, %206 : vector<2x128xf32>
    %208 = vector.extract_strided_slice %22 {offsets = [0, 384], sizes = [2, 128], strides = [1, 1]} : vector<2x512xf32> to vector<2x128xf32>
    %209 = arith.subf %208, %170 : vector<2x128xf32>
    %210 = math.exp %209 : vector<2x128xf32>
    %211 = arith.addf %202, %210 : vector<2x128xf32>
    %212 = vector.extract_strided_slice %83 {offsets = [0, 384], sizes = [2, 128], strides = [1, 1]} : vector<2x512xf32> to vector<2x128xf32>
    %213 = arith.mulf %210, %212 : vector<2x128xf32>
    %214 = arith.addf %205, %213 : vector<2x128xf32>
    %215 = arith.mulf %210, %210 : vector<2x128xf32>
    %216 = arith.addf %207, %215 : vector<2x128xf32>
    %c0_73 = arith.constant 0 : index
    %c0_74 = arith.constant 0 : index
    %217 = vector.load %arg18[%c0_73, %c0_74] : memref<2x128xf32, #tpu.memory_space<vmem>>, vector<2x128xf32>
    tpu.vector_store %arg18[%c0_73, %c0_74], %170 {strides = array<i32>} : memref<2x128xf32, #tpu.memory_space<vmem>>, vector<2x128xf32>,
    %c0_75 = arith.constant 0 : index
    %c0_76 = arith.constant 0 : index
    %218 = vector.load %arg19[%c0_75, %c0_76] : memref<2x128xf32, #tpu.memory_space<vmem>>, vector<2x128xf32>
    tpu.vector_store %arg19[%c0_75, %c0_76], %211 {strides = array<i32>} : memref<2x128xf32, #tpu.memory_space<vmem>>, vector<2x128xf32>,
    %c0_77 = arith.constant 0 : index
    %c0_78 = arith.constant 0 : index
    %219 = vector.load %arg20[%c0_77, %c0_78] : memref<2x128xf32, #tpu.memory_space<vmem>>, vector<2x128xf32>
    tpu.vector_store %arg20[%c0_77, %c0_78], %214 {strides = array<i32>} : memref<2x128xf32, #tpu.memory_space<vmem>>, vector<2x128xf32>,
    %c0_79 = arith.constant 0 : index
    %c0_80 = arith.constant 0 : index
    %220 = vector.load %arg21[%c0_79, %c0_80] : memref<2x128xf32, #tpu.memory_space<vmem>>, vector<2x128xf32>
    tpu.vector_store %arg21[%c0_79, %c0_80], %216 {strides = array<i32>} : memref<2x128xf32, #tpu.memory_space<vmem>>, vector<2x128xf32>,
    %c0_81 = arith.constant 0 : index
    %c512 = arith.constant 512 : index
    %221 = vector.load %arg2[%c0_81, %c512] : memref<2x1024xbf16, #tpu.memory_space<vmem>>, vector<2x512xbf16>
    %222 = arith.extf %221 : vector<2x512xbf16> to vector<2x512xf32>
    %c0_82 = arith.constant 0 : index
    %223 = memref.load %arg5[%c0_82] : memref<4xf32, #tpu.memory_space<smem>>
    %224 = vector.broadcast %223 : f32 to vector<2x512xf32>
    %225 = arith.mulf %222, %224 : vector<2x512xf32>
    %c0_83 = arith.constant 0 : index
    %c512_84 = arith.constant 512 : index
    %226 = vector.load %arg3[%c0_83, %c512_84] : memref<2x1024xbf16, #tpu.memory_space<vmem>>, vector<2x512xbf16>
    %227 = arith.extf %226 : vector<2x512xbf16> to vector<2x512xf32>
    %c1_85 = arith.constant 1 : index
    %228 = memref.load %arg5[%c1_85] : memref<4xf32, #tpu.memory_space<smem>>
    %229 = vector.broadcast %228 : f32 to vector<2x512xf32>
    %230 = arith.mulf %227, %229 : vector<2x512xf32>
    %231 = arith.addf %225, %230 : vector<2x512xf32>
    %c0_86 = arith.constant 0 : index
    %c512_87 = arith.constant 512 : index
    %232 = vector.load %arg4[%c0_86, %c512_87] : memref<2x1024xbf16, #tpu.memory_space<vmem>>, vector<2x512xbf16>
    %233 = arith.extf %232 : vector<2x512xbf16> to vector<2x512xf32>
    %c2_88 = arith.constant 2 : index
    %234 = memref.load %arg5[%c2_88] : memref<4xf32, #tpu.memory_space<smem>>
    %235 = vector.broadcast %234 : f32 to vector<2x512xf32>
    %236 = arith.mulf %233, %235 : vector<2x512xf32>
    %237 = arith.addf %231, %236 : vector<2x512xf32>
    %c3_89 = arith.constant 3 : index
    %238 = memref.load %arg5[%c3_89] : memref<4xf32, #tpu.memory_space<smem>>
    %239 = vector.broadcast %238 : f32 to vector<2x512xf32>
    %240 = arith.addf %237, %239 : vector<2x512xf32>
    %cst_90 = arith.constant 0.000000e+00 : f32
    %241 = vector.broadcast %cst_90 : f32 to vector<2x512xf32>
    %242 = arith.maximumf %240, %241 : vector<2x512xf32>
    %243 = math.absf %240 : vector<2x512xf32>
    %cst_91 = arith.constant 0.000000e+00 : f32
    %244 = vector.broadcast %cst_91 : f32 to vector<2x512xf32>
    %245 = arith.subf %244, %243 : vector<2x512xf32>
    %246 = math.exp %245 : vector<2x512xf32>
    %cst_92 = arith.constant 1.000000e+00 : f32
    %247 = vector.broadcast %cst_92 : f32 to vector<2x512xf32>
    %248 = arith.addf %247, %246 : vector<2x512xf32>
    %249 = math.log %248 : vector<2x512xf32>
    %250 = arith.addf %242, %249 : vector<2x512xf32>
    %cst_93 = arith.constant 1.000000e+02 : f32
    %251 = vector.broadcast %cst_93 : f32 to vector<2x512xf32>
    %252 = arith.minimumf %250, %251 : vector<2x512xf32>
    %c0_94 = arith.constant 0 : index
    %c0_95 = arith.constant 0 : index
    %253 = vector.load %arg12[%c0_94, %c0_95] : memref<2x128xf32, #tpu.memory_space<vmem>>, vector<2x128xf32>
    %254 = vector.extract_strided_slice %252 {offsets = [0, 0], sizes = [2, 128], strides = [1, 1]} : vector<2x512xf32> to vector<2x128xf32>
    %255 = vector.extract_strided_slice %252 {offsets = [0, 128], sizes = [2, 128], strides = [1, 1]} : vector<2x512xf32> to vector<2x128xf32>
    %256 = arith.addf %254, %255 : vector<2x128xf32>
    %257 = vector.extract_strided_slice %252 {offsets = [0, 256], sizes = [2, 128], strides = [1, 1]} : vector<2x512xf32> to vector<2x128xf32>
    %258 = arith.addf %256, %257 : vector<2x128xf32>
    %259 = vector.extract_strided_slice %252 {offsets = [0, 384], sizes = [2, 128], strides = [1, 1]} : vector<2x512xf32> to vector<2x128xf32>
    %260 = arith.addf %258, %259 : vector<2x128xf32>
    %261 = arith.addf %253, %260 : vector<2x128xf32>
    %c0_96 = arith.constant 0 : index
    %c0_97 = arith.constant 0 : index
    %262 = vector.load %arg12[%c0_96, %c0_97] : memref<2x128xf32, #tpu.memory_space<vmem>>, vector<2x128xf32>
    tpu.vector_store %arg12[%c0_96, %c0_97], %261 {strides = array<i32>} : memref<2x128xf32, #tpu.memory_space<vmem>>, vector<2x128xf32>,
    %c0_98 = arith.constant 0 : index
    %c512_99 = arith.constant 512 : index
    %263 = vector.load %arg6[%c0_98, %c512_99] : memref<2x1024xbf16, #tpu.memory_space<vmem>>, vector<2x512xbf16>
    %264 = arith.extf %263 : vector<2x512xbf16> to vector<2x512xf32>
    %c0_100 = arith.constant 0 : index
    %265 = memref.load %arg9[%c0_100] : memref<4xf32, #tpu.memory_space<smem>>
    %266 = vector.broadcast %265 : f32 to vector<2x512xf32>
    %267 = arith.mulf %264, %266 : vector<2x512xf32>
    %c0_101 = arith.constant 0 : index
    %c512_102 = arith.constant 512 : index
    %268 = vector.load %arg7[%c0_101, %c512_102] : memref<2x1024xbf16, #tpu.memory_space<vmem>>, vector<2x512xbf16>
    %269 = arith.extf %268 : vector<2x512xbf16> to vector<2x512xf32>
    %c1_103 = arith.constant 1 : index
    %270 = memref.load %arg9[%c1_103] : memref<4xf32, #tpu.memory_space<smem>>
    %271 = vector.broadcast %270 : f32 to vector<2x512xf32>
    %272 = arith.mulf %269, %271 : vector<2x512xf32>
    %273 = arith.addf %267, %272 : vector<2x512xf32>
    %c0_104 = arith.constant 0 : index
    %c512_105 = arith.constant 512 : index
    %274 = vector.load %arg8[%c0_104, %c512_105] : memref<2x1024xbf16, #tpu.memory_space<vmem>>, vector<2x512xbf16>
    %275 = arith.extf %274 : vector<2x512xbf16> to vector<2x512xf32>
    %c2_106 = arith.constant 2 : index
    %276 = memref.load %arg9[%c2_106] : memref<4xf32, #tpu.memory_space<smem>>
    %277 = vector.broadcast %276 : f32 to vector<2x512xf32>
    %278 = arith.mulf %275, %277 : vector<2x512xf32>
    %279 = arith.addf %273, %278 : vector<2x512xf32>
    %c3_107 = arith.constant 3 : index
    %280 = memref.load %arg9[%c3_107] : memref<4xf32, #tpu.memory_space<smem>>
    %281 = vector.broadcast %280 : f32 to vector<2x512xf32>
    %282 = arith.addf %279, %281 : vector<2x512xf32>
    %cst_108 = arith.constant 5.000000e-01 : f32
    %283 = vector.broadcast %cst_108 : f32 to vector<2x512xf32>
    %284 = arith.mulf %283, %282 : vector<2x512xf32>
    %285 = math.tanh %284 : vector<2x512xf32>
    %cst_109 = arith.constant 5.000000e-01 : f32
    %286 = vector.broadcast %cst_109 : f32 to vector<2x512xf32>
    %287 = arith.mulf %286, %285 : vector<2x512xf32>
    %cst_110 = arith.constant 5.000000e-01 : f32
    %288 = vector.broadcast %cst_110 : f32 to vector<2x512xf32>
    %289 = arith.addf %287, %288 : vector<2x512xf32>
    %c0_111 = arith.constant 0 : index
    %c0_112 = arith.constant 0 : index
    %290 = vector.load %arg13[%c0_111, %c0_112] : memref<2x128xf32, #tpu.memory_space<vmem>>, vector<2x128xf32>
    %291 = arith.mulf %289, %240 : vector<2x512xf32>
    %292 = vector.extract_strided_slice %291 {offsets = [0, 0], sizes = [2, 128], strides = [1, 1]} : vector<2x512xf32> to vector<2x128xf32>
    %293 = vector.extract_strided_slice %291 {offsets = [0, 128], sizes = [2, 128], strides = [1, 1]} : vector<2x512xf32> to vector<2x128xf32>
    %294 = arith.addf %292, %293 : vector<2x128xf32>
    %295 = vector.extract_strided_slice %291 {offsets = [0, 256], sizes = [2, 128], strides = [1, 1]} : vector<2x512xf32> to vector<2x128xf32>
    %296 = arith.addf %294, %295 : vector<2x128xf32>
    %297 = vector.extract_strided_slice %291 {offsets = [0, 384], sizes = [2, 128], strides = [1, 1]} : vector<2x512xf32> to vector<2x128xf32>
    %298 = arith.addf %296, %297 : vector<2x128xf32>
    %299 = arith.addf %290, %298 : vector<2x128xf32>
    %c0_113 = arith.constant 0 : index
    %c0_114 = arith.constant 0 : index
    %300 = vector.load %arg13[%c0_113, %c0_114] : memref<2x128xf32, #tpu.memory_space<vmem>>, vector<2x128xf32>
    tpu.vector_store %arg13[%c0_113, %c0_114], %299 {strides = array<i32>} : memref<2x128xf32, #tpu.memory_space<vmem>>, vector<2x128xf32>,
    %c0_115 = arith.constant 0 : index
    %c512_116 = arith.constant 512 : index
    %301 = vector.load %arg10[%c0_115, %c512_116] : memref<2x1024xf32, #tpu.memory_space<vmem>>, vector<2x512xf32>
    %c0_117 = arith.constant 0 : index
    %c0_118 = arith.constant 0 : index
    %302 = vector.load %arg14[%c0_117, %c0_118] : memref<2x128xf32, #tpu.memory_space<vmem>>, vector<2x128xf32>
    %303 = arith.mulf %301, %240 : vector<2x512xf32>
    %304 = vector.extract_strided_slice %303 {offsets = [0, 0], sizes = [2, 128], strides = [1, 1]} : vector<2x512xf32> to vector<2x128xf32>
    %305 = vector.extract_strided_slice %303 {offsets = [0, 128], sizes = [2, 128], strides = [1, 1]} : vector<2x512xf32> to vector<2x128xf32>
    %306 = arith.addf %304, %305 : vector<2x128xf32>
    %307 = vector.extract_strided_slice %303 {offsets = [0, 256], sizes = [2, 128], strides = [1, 1]} : vector<2x512xf32> to vector<2x128xf32>
    %308 = arith.addf %306, %307 : vector<2x128xf32>
    %309 = vector.extract_strided_slice %303 {offsets = [0, 384], sizes = [2, 128], strides = [1, 1]} : vector<2x512xf32> to vector<2x128xf32>
    %310 = arith.addf %308, %309 : vector<2x128xf32>
    %311 = arith.addf %302, %310 : vector<2x128xf32>
    %c0_119 = arith.constant 0 : index
    %c0_120 = arith.constant 0 : index
    %312 = vector.load %arg14[%c0_119, %c0_120] : memref<2x128xf32, #tpu.memory_space<vmem>>, vector<2x128xf32>
    tpu.vector_store %arg14[%c0_119, %c0_120], %311 {strides = array<i32>} : memref<2x128xf32, #tpu.memory_space<vmem>>, vector<2x128xf32>,
    %c0_121 = arith.constant 0 : index
    %c0_122 = arith.constant 0 : index
    %313 = vector.load %arg15[%c0_121, %c0_122] : memref<2x128xf32, #tpu.memory_space<vmem>>, vector<2x128xf32>
    %314 = vector.extract_strided_slice %240 {offsets = [0, 0], sizes = [2, 128], strides = [1, 1]} : vector<2x512xf32> to vector<2x128xf32>
    %315 = vector.extract_strided_slice %240 {offsets = [0, 128], sizes = [2, 128], strides = [1, 1]} : vector<2x512xf32> to vector<2x128xf32>
    %316 = arith.addf %314, %315 : vector<2x128xf32>
    %317 = vector.extract_strided_slice %240 {offsets = [0, 256], sizes = [2, 128], strides = [1, 1]} : vector<2x512xf32> to vector<2x128xf32>
    %318 = arith.addf %316, %317 : vector<2x128xf32>
    %319 = vector.extract_strided_slice %240 {offsets = [0, 384], sizes = [2, 128], strides = [1, 1]} : vector<2x512xf32> to vector<2x128xf32>
    %320 = arith.addf %318, %319 : vector<2x128xf32>
    %321 = arith.addf %313, %320 : vector<2x128xf32>
    %c0_123 = arith.constant 0 : index
    %c0_124 = arith.constant 0 : index
    %322 = vector.load %arg15[%c0_123, %c0_124] : memref<2x128xf32, #tpu.memory_space<vmem>>, vector<2x128xf32>
    tpu.vector_store %arg15[%c0_123, %c0_124], %321 {strides = array<i32>} : memref<2x128xf32, #tpu.memory_space<vmem>>, vector<2x128xf32>,
    %c0_125 = arith.constant 0 : index
    %c0_126 = arith.constant 0 : index
    %323 = vector.load %arg16[%c0_125, %c0_126] : memref<2x128xf32, #tpu.memory_space<vmem>>, vector<2x128xf32>
    %324 = vector.extract_strided_slice %301 {offsets = [0, 0], sizes = [2, 128], strides = [1, 1]} : vector<2x512xf32> to vector<2x128xf32>
    %325 = vector.extract_strided_slice %301 {offsets = [0, 128], sizes = [2, 128], strides = [1, 1]} : vector<2x512xf32> to vector<2x128xf32>
    %326 = arith.minimumf %324, %325 : vector<2x128xf32>
    %327 = vector.extract_strided_slice %301 {offsets = [0, 256], sizes = [2, 128], strides = [1, 1]} : vector<2x512xf32> to vector<2x128xf32>
    %328 = arith.minimumf %326, %327 : vector<2x128xf32>
    %329 = vector.extract_strided_slice %301 {offsets = [0, 384], sizes = [2, 128], strides = [1, 1]} : vector<2x512xf32> to vector<2x128xf32>
    %330 = arith.minimumf %328, %329 : vector<2x128xf32>
    %331 = arith.minimumf %323, %330 : vector<2x128xf32>
    %c0_127 = arith.constant 0 : index
    %c0_128 = arith.constant 0 : index
    %332 = vector.load %arg16[%c0_127, %c0_128] : memref<2x128xf32, #tpu.memory_space<vmem>>, vector<2x128xf32>
    tpu.vector_store %arg16[%c0_127, %c0_128], %331 {strides = array<i32>} : memref<2x128xf32, #tpu.memory_space<vmem>>, vector<2x128xf32>,
    %c0_129 = arith.constant 0 : index
    %c0_130 = arith.constant 0 : index
    %333 = vector.load %arg17[%c0_129, %c0_130] : memref<2x128xf32, #tpu.memory_space<vmem>>, vector<2x128xf32>
    %334 = vector.extract_strided_slice %301 {offsets = [0, 0], sizes = [2, 128], strides = [1, 1]} : vector<2x512xf32> to vector<2x128xf32>
    %335 = vector.extract_strided_slice %301 {offsets = [0, 128], sizes = [2, 128], strides = [1, 1]} : vector<2x512xf32> to vector<2x128xf32>
    %336 = arith.maximumf %334, %335 : vector<2x128xf32>
    %337 = vector.extract_strided_slice %301 {offsets = [0, 256], sizes = [2, 128], strides = [1, 1]} : vector<2x512xf32> to vector<2x128xf32>
    %338 = arith.maximumf %336, %337 : vector<2x128xf32>
    %339 = vector.extract_strided_slice %301 {offsets = [0, 384], sizes = [2, 128], strides = [1, 1]} : vector<2x512xf32> to vector<2x128xf32>
    %340 = arith.maximumf %338, %339 : vector<2x128xf32>
    %341 = arith.maximumf %333, %340 : vector<2x128xf32>
    %c0_131 = arith.constant 0 : index
    %c0_132 = arith.constant 0 : index
    %342 = vector.load %arg17[%c0_131, %c0_132] : memref<2x128xf32, #tpu.memory_space<vmem>>, vector<2x128xf32>
    tpu.vector_store %arg17[%c0_131, %c0_132], %341 {strides = array<i32>} : memref<2x128xf32, #tpu.memory_space<vmem>>, vector<2x128xf32>,
    %c0_133 = arith.constant 0 : index
    %c0_134 = arith.constant 0 : index
    %343 = vector.load %arg23[%c0_133, %c0_134] : memref<2x128xf32, #tpu.memory_space<vmem>>, vector<2x128xf32>
    %344 = vector.extract_strided_slice %301 {offsets = [0, 0], sizes = [2, 128], strides = [1, 1]} : vector<2x512xf32> to vector<2x128xf32>
    %345 = vector.extract_strided_slice %301 {offsets = [0, 128], sizes = [2, 128], strides = [1, 1]} : vector<2x512xf32> to vector<2x128xf32>
    %346 = arith.addf %344, %345 : vector<2x128xf32>
    %347 = vector.extract_strided_slice %301 {offsets = [0, 256], sizes = [2, 128], strides = [1, 1]} : vector<2x512xf32> to vector<2x128xf32>
    %348 = arith.addf %346, %347 : vector<2x128xf32>
    %349 = vector.extract_strided_slice %301 {offsets = [0, 384], sizes = [2, 128], strides = [1, 1]} : vector<2x512xf32> to vector<2x128xf32>
    %350 = arith.addf %348, %349 : vector<2x128xf32>
    %351 = arith.addf %343, %350 : vector<2x128xf32>
    %c0_135 = arith.constant 0 : index
    %c0_136 = arith.constant 0 : index
    %352 = vector.load %arg23[%c0_135, %c0_136] : memref<2x128xf32, #tpu.memory_space<vmem>>, vector<2x128xf32>
    tpu.vector_store %arg23[%c0_135, %c0_136], %351 {strides = array<i32>} : memref<2x128xf32, #tpu.memory_space<vmem>>, vector<2x128xf32>,
    %c0_137 = arith.constant 0 : index
    %c0_138 = arith.constant 0 : index
    %353 = vector.load %arg24[%c0_137, %c0_138] : memref<2x128xf32, #tpu.memory_space<vmem>>, vector<2x128xf32>
    %354 = arith.mulf %301, %301 : vector<2x512xf32>
    %355 = vector.extract_strided_slice %354 {offsets = [0, 0], sizes = [2, 128], strides = [1, 1]} : vector<2x512xf32> to vector<2x128xf32>
    %356 = vector.extract_strided_slice %354 {offsets = [0, 128], sizes = [2, 128], strides = [1, 1]} : vector<2x512xf32> to vector<2x128xf32>
    %357 = arith.addf %355, %356 : vector<2x128xf32>
    %358 = vector.extract_strided_slice %354 {offsets = [0, 256], sizes = [2, 128], strides = [1, 1]} : vector<2x512xf32> to vector<2x128xf32>
    %359 = arith.addf %357, %358 : vector<2x128xf32>
    %360 = vector.extract_strided_slice %354 {offsets = [0, 384], sizes = [2, 128], strides = [1, 1]} : vector<2x512xf32> to vector<2x128xf32>
    %361 = arith.addf %359, %360 : vector<2x128xf32>
    %362 = arith.addf %353, %361 : vector<2x128xf32>
    %c0_139 = arith.constant 0 : index
    %c0_140 = arith.constant 0 : index
    %363 = vector.load %arg24[%c0_139, %c0_140] : memref<2x128xf32, #tpu.memory_space<vmem>>, vector<2x128xf32>
    tpu.vector_store %arg24[%c0_139, %c0_140], %362 {strides = array<i32>} : memref<2x128xf32, #tpu.memory_space<vmem>>, vector<2x128xf32>,
    %c0_141 = arith.constant 0 : index
    %c0_142 = arith.constant 0 : index
    %364 = vector.load %arg22[%c0_141, %c0_142] : memref<2x128xf32, #tpu.memory_space<vmem>>, vector<2x128xf32>
    %cst_143 = arith.constant 0.000000e+00 : f32
    %365 = vector.broadcast %cst_143 : f32 to vector<2x512xf32>
    %366 = arith.cmpf ogt, %301, %365 : vector<2x512xf32>
    %367 = math.log %301 : vector<2x512xf32>
    %368 = arith.mulf %301, %367 : vector<2x512xf32>
    %cst_144 = arith.constant 0.000000e+00 : f32
    %369 = vector.broadcast %cst_144 : f32 to vector<2x512xf32>
    %370 = arith.select %366, %368, %369 : vector<2x512xi1>, vector<2x512xf32>
    %371 = vector.extract_strided_slice %370 {offsets = [0, 0], sizes = [2, 128], strides = [1, 1]} : vector<2x512xf32> to vector<2x128xf32>
    %372 = vector.extract_strided_slice %370 {offsets = [0, 128], sizes = [2, 128], strides = [1, 1]} : vector<2x512xf32> to vector<2x128xf32>
    %373 = arith.addf %371, %372 : vector<2x128xf32>
    %374 = vector.extract_strided_slice %370 {offsets = [0, 256], sizes = [2, 128], strides = [1, 1]} : vector<2x512xf32> to vector<2x128xf32>
    %375 = arith.addf %373, %374 : vector<2x128xf32>
    %376 = vector.extract_strided_slice %370 {offsets = [0, 384], sizes = [2, 128], strides = [1, 1]} : vector<2x512xf32> to vector<2x128xf32>
    %377 = arith.addf %375, %376 : vector<2x128xf32>
    %378 = arith.addf %364, %377 : vector<2x128xf32>
    %c0_145 = arith.constant 0 : index
    %c0_146 = arith.constant 0 : index
    %379 = vector.load %arg22[%c0_145, %c0_146] : memref<2x128xf32, #tpu.memory_space<vmem>>, vector<2x128xf32>
    tpu.vector_store %arg22[%c0_145, %c0_146], %378 {strides = array<i32>} : memref<2x128xf32, #tpu.memory_space<vmem>>, vector<2x128xf32>,
    %c0_147 = arith.constant 0 : index
    %c0_148 = arith.constant 0 : index
    %380 = vector.load %arg18[%c0_147, %c0_148] : memref<2x128xf32, #tpu.memory_space<vmem>>, vector<2x128xf32>
    %381 = vector.extract_strided_slice %240 {offsets = [0, 0], sizes = [2, 128], strides = [1, 1]} : vector<2x512xf32> to vector<2x128xf32>
    %382 = vector.extract_strided_slice %240 {offsets = [0, 128], sizes = [2, 128], strides = [1, 1]} : vector<2x512xf32> to vector<2x128xf32>
    %383 = arith.maximumf %381, %382 : vector<2x128xf32>
    %384 = vector.extract_strided_slice %240 {offsets = [0, 256], sizes = [2, 128], strides = [1, 1]} : vector<2x512xf32> to vector<2x128xf32>
    %385 = arith.maximumf %383, %384 : vector<2x128xf32>
    %386 = vector.extract_strided_slice %240 {offsets = [0, 384], sizes = [2, 128], strides = [1, 1]} : vector<2x512xf32> to vector<2x128xf32>
    %387 = arith.maximumf %385, %386 : vector<2x128xf32>
    %388 = arith.maximumf %380, %387 : vector<2x128xf32>
    %c0_149 = arith.constant 0 : index
    %c0_150 = arith.constant 0 : index
    %389 = vector.load %arg18[%c0_149, %c0_150] : memref<2x128xf32, #tpu.memory_space<vmem>>, vector<2x128xf32>
    %390 = arith.subf %389, %388 : vector<2x128xf32>
    %391 = math.exp %390 : vector<2x128xf32>
    %c0_151 = arith.constant 0 : index
    %c0_152 = arith.constant 0 : index
    %392 = vector.load %arg19[%c0_151, %c0_152] : memref<2x128xf32, #tpu.memory_space<vmem>>, vector<2x128xf32>
    %393 = arith.mulf %392, %391 : vector<2x128xf32>
    %c0_153 = arith.constant 0 : index
    %c0_154 = arith.constant 0 : index
    %394 = vector.load %arg20[%c0_153, %c0_154] : memref<2x128xf32, #tpu.memory_space<vmem>>, vector<2x128xf32>
    %395 = arith.mulf %394, %391 : vector<2x128xf32>
    %c0_155 = arith.constant 0 : index
    %c0_156 = arith.constant 0 : index
    %396 = vector.load %arg21[%c0_155, %c0_156] : memref<2x128xf32, #tpu.memory_space<vmem>>, vector<2x128xf32>
    %397 = arith.mulf %391, %391 : vector<2x128xf32>
    %398 = arith.mulf %396, %397 : vector<2x128xf32>
    %399 = vector.extract_strided_slice %240 {offsets = [0, 0], sizes = [2, 128], strides = [1, 1]} : vector<2x512xf32> to vector<2x128xf32>
    %400 = arith.subf %399, %388 : vector<2x128xf32>
    %401 = math.exp %400 : vector<2x128xf32>
    %402 = arith.addf %393, %401 : vector<2x128xf32>
    %403 = vector.extract_strided_slice %301 {offsets = [0, 0], sizes = [2, 128], strides = [1, 1]} : vector<2x512xf32> to vector<2x128xf32>
    %404 = arith.mulf %401, %403 : vector<2x128xf32>
    %405 = arith.addf %395, %404 : vector<2x128xf32>
    %406 = arith.mulf %401, %401 : vector<2x128xf32>
    %407 = arith.addf %398, %406 : vector<2x128xf32>
    %408 = vector.extract_strided_slice %240 {offsets = [0, 128], sizes = [2, 128], strides = [1, 1]} : vector<2x512xf32> to vector<2x128xf32>
    %409 = arith.subf %408, %388 : vector<2x128xf32>
    %410 = math.exp %409 : vector<2x128xf32>
    %411 = arith.addf %402, %410 : vector<2x128xf32>
    %412 = vector.extract_strided_slice %301 {offsets = [0, 128], sizes = [2, 128], strides = [1, 1]} : vector<2x512xf32> to vector<2x128xf32>
    %413 = arith.mulf %410, %412 : vector<2x128xf32>
    %414 = arith.addf %405, %413 : vector<2x128xf32>
    %415 = arith.mulf %410, %410 : vector<2x128xf32>
    %416 = arith.addf %407, %415 : vector<2x128xf32>
    %417 = vector.extract_strided_slice %240 {offsets = [0, 256], sizes = [2, 128], strides = [1, 1]} : vector<2x512xf32> to vector<2x128xf32>
    %418 = arith.subf %417, %388 : vector<2x128xf32>
    %419 = math.exp %418 : vector<2x128xf32>
    %420 = arith.addf %411, %419 : vector<2x128xf32>
    %421 = vector.extract_strided_slice %301 {offsets = [0, 256], sizes = [2, 128], strides = [1, 1]} : vector<2x512xf32> to vector<2x128xf32>
    %422 = arith.mulf %419, %421 : vector<2x128xf32>
    %423 = arith.addf %414, %422 : vector<2x128xf32>
    %424 = arith.mulf %419, %419 : vector<2x128xf32>
    %425 = arith.addf %416, %424 : vector<2x128xf32>
    %426 = vector.extract_strided_slice %240 {offsets = [0, 384], sizes = [2, 128], strides = [1, 1]} : vector<2x512xf32> to vector<2x128xf32>
    %427 = arith.subf %426, %388 : vector<2x128xf32>
    %428 = math.exp %427 : vector<2x128xf32>
    %429 = arith.addf %420, %428 : vector<2x128xf32>
    %430 = vector.extract_strided_slice %301 {offsets = [0, 384], sizes = [2, 128], strides = [1, 1]} : vector<2x512xf32> to vector<2x128xf32>
    %431 = arith.mulf %428, %430 : vector<2x128xf32>
    %432 = arith.addf %423, %431 : vector<2x128xf32>
    %433 = arith.mulf %428, %428 : vector<2x128xf32>
    %434 = arith.addf %425, %433 : vector<2x128xf32>
    %c0_157 = arith.constant 0 : index
    %c0_158 = arith.constant 0 : index
    %435 = vector.load %arg18[%c0_157, %c0_158] : memref<2x128xf32, #tpu.memory_space<vmem>>, vector<2x128xf32>
    tpu.vector_store %arg18[%c0_157, %c0_158], %388 {strides = array<i32>} : memref<2x128xf32, #tpu.memory_space<vmem>>, vector<2x128xf32>,
    %c0_159 = arith.constant 0 : index
    %c0_160 = arith.constant 0 : index
    %436 = vector.load %arg19[%c0_159, %c0_160] : memref<2x128xf32, #tpu.memory_space<vmem>>, vector<2x128xf32>
    tpu.vector_store %arg19[%c0_159, %c0_160], %429 {strides = array<i32>} : memref<2x128xf32, #tpu.memory_space<vmem>>, vector<2x128xf32>,
    %c0_161 = arith.constant 0 : index
    %c0_162 = arith.constant 0 : index
    %437 = vector.load %arg20[%c0_161, %c0_162] : memref<2x128xf32, #tpu.memory_space<vmem>>, vector<2x128xf32>
    tpu.vector_store %arg20[%c0_161, %c0_162], %432 {strides = array<i32>} : memref<2x128xf32, #tpu.memory_space<vmem>>, vector<2x128xf32>,
    %c0_163 = arith.constant 0 : index
    %c0_164 = arith.constant 0 : index
    %438 = vector.load %arg21[%c0_163, %c0_164] : memref<2x128xf32, #tpu.memory_space<vmem>>, vector<2x128xf32>
    tpu.vector_store %arg21[%c0_163, %c0_164], %434 {strides = array<i32>} : memref<2x128xf32, #tpu.memory_space<vmem>>, vector<2x128xf32>,
    %c0_i32_165 = arith.constant 0 : i32
    %439 = arith.cmpi eq, %arg1, %c0_i32_165 : i32
    %440 = arith.extui %439 : i1 to i32
    %c0_i32_166 = arith.constant 0 : i32
    %441 = arith.cmpi ne, %440, %c0_i32_166 : i32
    scf.if %441 {
      %c0_167 = arith.constant 0 : index
      %c0_168 = arith.constant 0 : index
      %442 = vector.load %arg12[%c0_167, %c0_168] : memref<2x128xf32, #tpu.memory_space<vmem>>, vector<2x128xf32>
      %cst_169 = arith.constant dense<0.000000e+00> : vector<2xf32>
      %443 = vector.multi_reduction <add>, %442, %cst_169 [1] : vector<2x128xf32> to vector<2xf32>
      %444 = vector.shape_cast %443 : vector<2xf32> to vector<2x1xf32>
      %cst_170 = arith.constant 0.000000e+00 : f32
      %445 = vector.broadcast %cst_170 : f32 to vector<2x1xf32>
      %c0_171 = arith.constant 0 : index
      %c0_172 = arith.constant 0 : index
      %446 = vector.load %arg13[%c0_171, %c0_172] : memref<2x128xf32, #tpu.memory_space<vmem>>, vector<2x128xf32>
      %cst_173 = arith.constant dense<0.000000e+00> : vector<2xf32>
      %447 = vector.multi_reduction <add>, %446, %cst_173 [1] : vector<2x128xf32> to vector<2xf32>
      %448 = vector.shape_cast %447 : vector<2xf32> to vector<2x1xf32>
      %449 = arith.subf %444, %448 : vector<2x1xf32>
      %cst_174 = arith.constant 4.8828125E-4 : f32
      %450 = vector.broadcast %cst_174 : f32 to vector<2x1xf32>
      %451 = arith.mulf %450, %449 : vector<2x1xf32>
      %452 = arith.addf %445, %451 : vector<2x1xf32>
      %c0_175 = arith.constant 0 : index
      %c0_176 = arith.constant 0 : index
      %453 = vector.load %arg14[%c0_175, %c0_176] : memref<2x128xf32, #tpu.memory_space<vmem>>, vector<2x128xf32>
      %cst_177 = arith.constant dense<0.000000e+00> : vector<2xf32>
      %454 = vector.multi_reduction <add>, %453, %cst_177 [1] : vector<2x128xf32> to vector<2xf32>
      %455 = vector.shape_cast %454 : vector<2xf32> to vector<2x1xf32>
      %456 = arith.subf %444, %455 : vector<2x1xf32>
      %cst_178 = arith.constant 4.8828125E-4 : f32
      %457 = vector.broadcast %cst_178 : f32 to vector<2x1xf32>
      %458 = arith.mulf %457, %456 : vector<2x1xf32>
      %459 = arith.addf %452, %458 : vector<2x1xf32>
      %c0_179 = arith.constant 0 : index
      %c0_180 = arith.constant 0 : index
      %460 = vector.load %arg14[%c0_179, %c0_180] : memref<2x128xf32, #tpu.memory_space<vmem>>, vector<2x128xf32>
      %cst_181 = arith.constant dense<0.000000e+00> : vector<2xf32>
      %461 = vector.multi_reduction <add>, %460, %cst_181 [1] : vector<2x128xf32> to vector<2xf32>
      %462 = vector.shape_cast %461 : vector<2xf32> to vector<2x1xf32>
      %c0_182 = arith.constant 0 : index
      %c0_183 = arith.constant 0 : index
      %463 = vector.load %arg15[%c0_182, %c0_183] : memref<2x128xf32, #tpu.memory_space<vmem>>, vector<2x128xf32>
      %cst_184 = arith.constant dense<0.000000e+00> : vector<2xf32>
      %464 = vector.multi_reduction <add>, %463, %cst_184 [1] : vector<2x128xf32> to vector<2xf32>
      %465 = vector.shape_cast %464 : vector<2xf32> to vector<2x1xf32>
      %c0_185 = arith.constant 0 : index
      %c0_186 = arith.constant 0 : index
      %466 = vector.load %arg16[%c0_185, %c0_186] : memref<2x128xf32, #tpu.memory_space<vmem>>, vector<2x128xf32>
      %cst_187 = arith.constant dense<0x7F800000> : vector<2xf32>
      %467 = vector.multi_reduction <minimumf>, %466, %cst_187 [1] : vector<2x128xf32> to vector<2xf32>
      %468 = vector.shape_cast %467 : vector<2xf32> to vector<2x1xf32>
      %c0_188 = arith.constant 0 : index
      %c0_189 = arith.constant 0 : index
      %469 = vector.load %arg17[%c0_188, %c0_189] : memref<2x128xf32, #tpu.memory_space<vmem>>, vector<2x128xf32>
      %cst_190 = arith.constant dense<0xFF800000> : vector<2xf32>
      %470 = vector.multi_reduction <maximumf>, %469, %cst_190 [1] : vector<2x128xf32> to vector<2xf32>
      %471 = vector.shape_cast %470 : vector<2xf32> to vector<2x1xf32>
      %c0_191 = arith.constant 0 : index
      %c0_192 = arith.constant 0 : index
      %472 = vector.load %arg18[%c0_191, %c0_192] : memref<2x128xf32, #tpu.memory_space<vmem>>, vector<2x128xf32>
      %cst_193 = arith.constant dense<0xFF800000> : vector<2xf32>
      %473 = vector.multi_reduction <maximumf>, %472, %cst_193 [1] : vector<2x128xf32> to vector<2xf32>
      %474 = vector.shape_cast %473 : vector<2xf32> to vector<2x1xf32>
      %c0_194 = arith.constant 0 : index
      %c0_195 = arith.constant 0 : index
      %475 = vector.load %arg18[%c0_194, %c0_195] : memref<2x128xf32, #tpu.memory_space<vmem>>, vector<2x128xf32>
      %476 = vector.broadcast %474 : vector<2x1xf32> to vector<2x128xf32>
      %477 = arith.subf %475, %476 : vector<2x128xf32>
      %478 = math.exp %477 : vector<2x128xf32>
      %c0_196 = arith.constant 0 : index
      %c0_197 = arith.constant 0 : index
      %479 = vector.load %arg19[%c0_196, %c0_197] : memref<2x128xf32, #tpu.memory_space<vmem>>, vector<2x128xf32>
      %480 = arith.mulf %479, %478 : vector<2x128xf32>
      %cst_198 = arith.constant dense<0.000000e+00> : vector<2xf32>
      %481 = vector.multi_reduction <add>, %480, %cst_198 [1] : vector<2x128xf32> to vector<2xf32>
      %482 = vector.shape_cast %481 : vector<2xf32> to vector<2x1xf32>
      %c0_199 = arith.constant 0 : index
      %c0_200 = arith.constant 0 : index
      %483 = vector.load %arg20[%c0_199, %c0_200] : memref<2x128xf32, #tpu.memory_space<vmem>>, vector<2x128xf32>
      %484 = arith.mulf %483, %478 : vector<2x128xf32>
      %cst_201 = arith.constant dense<0.000000e+00> : vector<2xf32>
      %485 = vector.multi_reduction <add>, %484, %cst_201 [1] : vector<2x128xf32> to vector<2xf32>
      %486 = vector.shape_cast %485 : vector<2xf32> to vector<2x1xf32>
      %c0_202 = arith.constant 0 : index
      %c0_203 = arith.constant 0 : index
      %487 = vector.load %arg21[%c0_202, %c0_203] : memref<2x128xf32, #tpu.memory_space<vmem>>, vector<2x128xf32>
      %488 = arith.mulf %478, %478 : vector<2x128xf32>
      %489 = arith.mulf %487, %488 : vector<2x128xf32>
      %cst_204 = arith.constant dense<0.000000e+00> : vector<2xf32>
      %490 = vector.multi_reduction <add>, %489, %cst_204 [1] : vector<2x128xf32> to vector<2xf32>
      %491 = vector.shape_cast %490 : vector<2xf32> to vector<2x1xf32>
      %492 = math.log %482 : vector<2x1xf32>
      %493 = arith.addf %474, %492 : vector<2x1xf32>
      %c0_205 = arith.constant 0 : index
      %c0_206 = arith.constant 0 : index
      %494 = vector.load %arg22[%c0_205, %c0_206] : memref<2x128xf32, #tpu.memory_space<vmem>>, vector<2x128xf32>
      %cst_207 = arith.constant dense<0.000000e+00> : vector<2xf32>
      %495 = vector.multi_reduction <add>, %494, %cst_207 [1] : vector<2x128xf32> to vector<2xf32>
      %496 = vector.shape_cast %495 : vector<2xf32> to vector<2x1xf32>
      %497 = arith.subf %496, %462 : vector<2x1xf32>
      %c0_208 = arith.constant 0 : index
      %c0_209 = arith.constant 0 : index
      %498 = vector.load %arg23[%c0_208, %c0_209] : memref<2x128xf32, #tpu.memory_space<vmem>>, vector<2x128xf32>
      %cst_210 = arith.constant dense<0.000000e+00> : vector<2xf32>
      %499 = vector.multi_reduction <add>, %498, %cst_210 [1] : vector<2x128xf32> to vector<2xf32>
      %500 = vector.shape_cast %499 : vector<2xf32> to vector<2x1xf32>
      %501 = arith.mulf %500, %493 : vector<2x1xf32>
      %502 = arith.addf %497, %501 : vector<2x1xf32>
      %503 = arith.divf %486, %482 : vector<2x1xf32>
      %504 = math.sqrt %491 : vector<2x1xf32>
      %505 = arith.divf %504, %482 : vector<2x1xf32>
      %c0_211 = arith.constant 0 : index
      %c0_212 = arith.constant 0 : index
      %506 = vector.load %arg24[%c0_211, %c0_212] : memref<2x128xf32, #tpu.memory_space<vmem>>, vector<2x128xf32>
      %cst_213 = arith.constant dense<0.000000e+00> : vector<2xf32>
      %507 = vector.multi_reduction <add>, %506, %cst_213 [1] : vector<2x128xf32> to vector<2xf32>
      %508 = vector.shape_cast %507 : vector<2xf32> to vector<2x1xf32>
      %509 = math.sqrt %508 : vector<2x1xf32>
      %cst_214 = arith.constant 9.99999993E-9 : f32
      %510 = vector.broadcast %cst_214 : f32 to vector<2x1xf32>
      %511 = arith.maximumf %505, %510 : vector<2x1xf32>
      %cst_215 = arith.constant 9.99999993E-9 : f32
      %512 = vector.broadcast %cst_215 : f32 to vector<2x1xf32>
      %513 = arith.maximumf %509, %512 : vector<2x1xf32>
      %514 = arith.mulf %511, %513 : vector<2x1xf32>
      %515 = arith.divf %503, %514 : vector<2x1xf32>
      %516 = arith.mulf %468, %465 : vector<2x1xf32>
      %517 = arith.subf %462, %516 : vector<2x1xf32>
      %518 = arith.subf %471, %468 : vector<2x1xf32>
      %519 = arith.divf %517, %518 : vector<2x1xf32>
      %520 = arith.subf %444, %519 : vector<2x1xf32>
      %cst_216 = arith.constant 2.500000e-01 : f32
      %521 = vector.broadcast %cst_216 : f32 to vector<2x1xf32>
      %522 = arith.mulf %521, %502 : vector<2x1xf32>
      %523 = arith.addf %459, %522 : vector<2x1xf32>
      %cst_217 = arith.constant 1.46484381E-4 : f32
      %524 = vector.broadcast %cst_217 : f32 to vector<2x1xf32>
      %525 = arith.mulf %524, %520 : vector<2x1xf32>
      %526 = arith.addf %523, %525 : vector<2x1xf32>
      %cst_218 = arith.constant 1.000000e+00 : f32
      %527 = vector.broadcast %cst_218 : f32 to vector<2x1xf32>
      %528 = arith.subf %527, %515 : vector<2x1xf32>
      %cst_219 = arith.constant 1.000000e-01 : f32
      %529 = vector.broadcast %cst_219 : f32 to vector<2x1xf32>
      %530 = arith.mulf %529, %528 : vector<2x1xf32>
      %531 = arith.addf %526, %530 : vector<2x1xf32>
      %c0_220 = arith.constant 0 : index
      %c0_221 = arith.constant 0 : index
      %532 = vector.load %arg11[%c0_220, %c0_221] : memref<2x1xf32, #tpu.memory_space<vmem>>, vector<2x1xf32>
      tpu.vector_store %arg11[%c0_220, %c0_221], %531 {strides = array<i32>} : memref<2x1xf32, #tpu.memory_space<vmem>>, vector<2x1xf32>,
    } else {
    }
    return
  }
  func.func @transform_0(%arg0: i32, %arg1: i32) -> (i32, i32) {
    %c0_i32 = arith.constant 0 : i32
    %0 = arith.addi %c0_i32, %arg1 : i32
    %c0_i32_0 = arith.constant 0 : i32
    return %arg0, %0 : i32, i32
  }
  func.func @transform_1(%arg0: i32, %arg1: i32) -> (i32, i32) {
    %c1_i32 = arith.constant 1 : i32
    %0 = arith.addi %c1_i32, %arg1 : i32
    %c0_i32 = arith.constant 0 : i32
    return %arg0, %0 : i32, i32
  }
  func.func @transform_2(%arg0: i32, %arg1: i32) -> (i32, i32) {
    %c2_i32 = arith.constant 2 : i32
    %0 = arith.addi %c2_i32, %arg1 : i32
    %c0_i32 = arith.constant 0 : i32
    return %arg0, %0 : i32, i32
  }
  func.func @transform_3(%arg0: i32, %arg1: i32) -> i32 {
    %c0_i32 = arith.constant 0 : i32
    %c0_i32_0 = arith.constant 0 : i32
    return %c0_i32 : i32
  }
  func.func @transform_4(%arg0: i32, %arg1: i32) -> (i32, i32) {
    %c0_i32 = arith.constant 0 : i32
    %0 = arith.addi %c0_i32, %arg1 : i32
    %c0_i32_0 = arith.constant 0 : i32
    return %arg0, %0 : i32, i32
  }
  func.func @transform_5(%arg0: i32, %arg1: i32) -> (i32, i32) {
    %c1_i32 = arith.constant 1 : i32
    %0 = arith.addi %c1_i32, %arg1 : i32
    %c0_i32 = arith.constant 0 : i32
    return %arg0, %0 : i32, i32
  }
  func.func @transform_6(%arg0: i32, %arg1: i32) -> (i32, i32) {
    %c2_i32 = arith.constant 2 : i32
    %0 = arith.addi %c2_i32, %arg1 : i32
    %c0_i32 = arith.constant 0 : i32
    return %arg0, %0 : i32, i32
  }
  func.func @transform_7(%arg0: i32, %arg1: i32) -> i32 {
    %c0_i32 = arith.constant 0 : i32
    %c0_i32_0 = arith.constant 0 : i32
    return %c0_i32 : i32
  }
  func.func @transform_8(%arg0: i32, %arg1: i32) -> (i32, i32) {
    %c0_i32 = arith.constant 0 : i32
    return %arg0, %arg1 : i32, i32
  }
  func.func @transform_9(%arg0: i32, %arg1: i32) -> (i32, i32) {
    %c0_i32 = arith.constant 0 : i32
    %c0_i32_0 = arith.constant 0 : i32
    return %arg0, %c0_i32 : i32, i32
  }
}

</mosaic_0001>

<llo_original>
// kernel: tpu_custom_call.1
$region0: #{tpu_custom_call.1}
  #allocation0 [shape = 'u32[]', space=smem, size = 0x4, offset = 0x4, fixed_abs, tag = 'smem constant byte address 0x4 - core index']
  #allocation1 [shape = 'u32[144,128]{1,0:T(1,128)}', space=vmem, size = 0x12000, scoped, tag = 'internal scratch']
  #allocation2 [shape = 'f32[2,128]{1,0:T(2,128)}', space=vmem, size = 0x400, scoped, tag = 'scratch operand']
  #allocation3 [shape = 'f32[2,128]{1,0:T(2,128)}', space=vmem, size = 0x400, scoped, tag = 'scratch operand']
  #allocation4 [shape = 'f32[2,128]{1,0:T(2,128)}', space=vmem, size = 0x400, scoped, tag = 'scratch operand']
  #allocation5 [shape = 'f32[2,128]{1,0:T(2,128)}', space=vmem, size = 0x400, scoped, tag = 'scratch operand']
  #allocation6 [shape = 'f32[2,128]{1,0:T(2,128)}', space=vmem, size = 0x400, scoped, tag = 'scratch operand']
  #allocation7 [shape = 'f32[2,128]{1,0:T(2,128)}', space=vmem, size = 0x400, scoped, tag = 'scratch operand']
  #allocation8 [shape = 'f32[2,128]{1,0:T(2,128)}', space=vmem, size = 0x400, scoped, tag = 'scratch operand']
  #allocation9 [shape = 'f32[2,128]{1,0:T(2,128)}', space=vmem, size = 0x400, scoped, tag = 'scratch operand']
  #allocation10 [shape = 'f32[2,128]{1,0:T(2,128)}', space=vmem, size = 0x400, scoped, tag = 'scratch operand']
  #allocation11 [shape = 'f32[2,128]{1,0:T(2,128)}', space=vmem, size = 0x400, scoped, tag = 'scratch operand']
  #allocation12 [shape = 'f32[2,128]{1,0:T(2,128)}', space=vmem, size = 0x400, scoped, tag = 'scratch operand']
  #allocation13 [shape = 'f32[2,128]{1,0:T(2,128)}', space=vmem, size = 0x400, scoped, tag = 'scratch operand']
  #allocation14 [shape = 'f32[2,128]{1,0:T(2,128)}', space=vmem, size = 0x400, scoped, tag = 'scratch operand']
  %s0 = inlined_call_operand.hbm [shape: bf16[2,3072], index: 0, kind: input, shape index: {}]
  %s1 = inlined_call_operand.hbm [shape: bf16[2,3072], index: 1, kind: input, shape index: {}]
  %s2 = inlined_call_operand.hbm [shape: bf16[2,3072], index: 2, kind: input, shape index: {}]
  %s3 = inlined_call_operand.vmem [shape: f32[4], index: 3, kind: input, shape index: {}]
  %s4 = inlined_call_operand.hbm [shape: bf16[2,3072], index: 4, kind: input, shape index: {}]
  %s5 = inlined_call_operand.hbm [shape: bf16[2,3072], index: 5, kind: input, shape index: {}]
  %s6 = inlined_call_operand.hbm [shape: bf16[2,3072], index: 6, kind: input, shape index: {}]
  %s7 = inlined_call_operand.vmem [shape: f32[4], index: 7, kind: input, shape index: {}]
  %s8 = inlined_call_operand.hbm [shape: f32[2,1024], index: 8, kind: input, shape index: {}]
  %s9 = inlined_call_operand.vmem [shape: f32[2,1], index: 9, kind: output, shape index: {}]
  %s10 = sld [smem:[#allocation0]]
  $region90: #{tpu_custom_call.1} parent=0
    _
  %s12 = ssub.s32 1, %s10
  %s13 = scalar_select 0, %s12, %s10
  $region1: #{tpu_custom_call.1} parent=0
    #allocation15 [shape = 'u8[4096]{0}', space=vmem, size = 0x1000, scoped, tag = 'input window, operand 0, single buffered']
    #allocation16 [shape = 's32[1]{0}', space=sflag, size = 0x4, scoped, tag = 'scoped memory for tpu_custom_call.1']
    #allocation17 [shape = 's32[1]{0}', space=sflag, size = 0x4, scoped, tag = 'scoped memory for tpu_custom_call.1']
    #allocation18 [shape = 'u8[4096]{0}', space=vmem, size = 0x1000, scoped, tag = 'input window, operand 1, single buffered']
    #allocation19 [shape = 's32[1]{0}', space=sflag, size = 0x4, scoped, tag = 'scoped memory for tpu_custom_call.1']
    #allocation20 [shape = 'u8[4096]{0}', space=vmem, size = 0x1000, scoped, tag = 'input window, operand 2, single buffered']
    #allocation21 [shape = 'u8[512]{0}', space=smem, size = 0x200, scoped, tag = 'input window, operand 3, single buffered']
    #allocation22 [shape = 'u8[4096]{0}', space=vmem, size = 0x1000, scoped, tag = 'input window, operand 4, single buffered']
    #allocation23 [shape = 's32[1]{0}', space=sflag, size = 0x4, scoped, tag = 'scoped memory for tpu_custom_call.1']
    #allocation24 [shape = 'u8[4096]{0}', space=vmem, size = 0x1000, scoped, tag = 'input window, operand 5, single buffered']
    #allocation25 [shape = 'u8[4096]{0}', space=vmem, size = 0x1000, scoped, tag = 'input window, operand 6, single buffered']
    #allocation26 [shape = 's32[1]{0}', space=sflag, size = 0x4, scoped, tag = 'scoped memory for tpu_custom_call.1']
    #allocation27 [shape = 'u8[512]{0}', space=smem, size = 0x200, scoped, tag = 'input window, operand 7, single buffered']
    #allocation28 [shape = 's32[1]{0}', space=sflag, size = 0x4, scoped, tag = 'scoped memory for tpu_custom_call.1']
    #allocation29 [shape = 'u8[8192]{0}', space=vmem, size = 0x2000, scoped, tag = 'input window, operand 8, single buffered']
    %14 = vsyncpa [#allocation16], 0
    %15 = vsyncpa [#allocation19], 0
    %16 = vsyncpa [#allocation17], 0
    %17 = vsyncpa [#allocation23], 0
    %18 = vsyncpa [#allocation26], 0
    %19 = vsyncpa [#allocation28], 0
    // Predicated region
    $region2: #{tpu_custom_call.1} parent=1 // pred_check
      _
    $region3: #{tpu_custom_call.1} parent=1 // pred_check_branch
      %21 = sbr.rel (0) target = $region5
    $region4: #{tpu_custom_call.1} parent=1 // pred_region
      %s23 = ssub.s32 128, 128
      %24 = vsyncadd [#allocation16], %s23
      %s26 = sshll.u32 [#allocation15], 4
      %s27 = int_to_ptr.vmem [resolvable:$true] %s26
      %29 = dma.hbm_to_vmem [thread:$0]  %s0, 128, %s27, [#allocation16]
    $region5: #{tpu_custom_call.1} parent=1 // pred_fallthru
      _
    // Predicated region
    $region6: #{tpu_custom_call.1} parent=1 // pred_check
      _
    $region7: #{tpu_custom_call.1} parent=1 // pred_check_branch
      %31 = sbr.rel (0) target = $region9
    $region8: #{tpu_custom_call.1} parent=1 // pred_region
      %s32 = sadd.s32 0, 1
      %s33 = smul.u32 8, %s32
      %s35 = ssub.s32 128, 128
      %36 = vsyncadd [#allocation19], %s35
      %s37 = smul.addr %s33, 16
      %s38 = scalar_lea.hbm %s1, %s37
      %s40 = sshll.u32 [#allocation18], 4
      %s41 = int_to_ptr.vmem [resolvable:$true] %s40
      %43 = dma.hbm_to_vmem [thread:$0]  %s38, 128, %s41, [#allocation19]
    $region9: #{tpu_custom_call.1} parent=1 // pred_fallthru
      _
    // Predicated region
    $region10: #{tpu_custom_call.1} parent=1 // pred_check
      _
    $region11: #{tpu_custom_call.1} parent=1 // pred_check_branch
      %45 = sbr.rel (0) target = $region13
    $region12: #{tpu_custom_call.1} parent=1 // pred_region
      %s46 = sadd.s32 0, 2
      %s47 = smul.u32 8, %s46
      %s49 = ssub.s32 128, 128
      %50 = vsyncadd [#allocation19], %s49
      %s51 = smul.addr %s47, 16
      %s52 = scalar_lea.hbm %s2, %s51
      %s54 = sshll.u32 [#allocation20], 4
      %s55 = int_to_ptr.vmem [resolvable:$true] %s54
      %57 = dma.hbm_to_vmem [thread:$0]  %s52, 128, %s55, [#allocation19]
    $region13: #{tpu_custom_call.1} parent=1 // pred_fallthru
      _
    // Predicated region
    $region14: #{tpu_custom_call.1} parent=1 // pred_check
      _
    $region15: #{tpu_custom_call.1} parent=1 // pred_check_branch
      %59 = sbr.rel (0) target = $region17
    $region16: #{tpu_custom_call.1} parent=1 // pred_region
      %s61 = ssub.s32 16, 16
      %62 = vsyncadd [#allocation17], %s61
      %s64 = sshll.u32 %s3, 4
      %s65 = int_to_ptr.vmem [resolvable:$true] %s64
      %67 = dma.vmem_to_smem %s65, 16, [#allocation21], [#allocation17]
    $region17: #{tpu_custom_call.1} parent=1 // pred_fallthru
      _
    // Predicated region
    $region18: #{tpu_custom_call.1} parent=1 // pred_check
      _
    $region19: #{tpu_custom_call.1} parent=1 // pred_check_branch
      %69 = sbr.rel (0) target = $region21
    $region20: #{tpu_custom_call.1} parent=1 // pred_region
      %s71 = ssub.s32 128, 128
      %72 = vsyncadd [#allocation23], %s71
      %s74 = sshll.u32 [#allocation22], 4
      %s75 = int_to_ptr.vmem [resolvable:$true] %s74
      %77 = dma.hbm_to_vmem [thread:$0]  %s4, 128, %s75, [#allocation23]
    $region21: #{tpu_custom_call.1} parent=1 // pred_fallthru
      _
    // Predicated region
    $region22: #{tpu_custom_call.1} parent=1 // pred_check
      _
    $region23: #{tpu_custom_call.1} parent=1 // pred_check_branch
      %79 = sbr.rel (0) target = $region25
    $region24: #{tpu_custom_call.1} parent=1 // pred_region
      %s80 = sadd.s32 0, 1
      %s81 = smul.u32 8, %s80
      %s83 = ssub.s32 128, 128
      %84 = vsyncadd [#allocation23], %s83
      %s85 = smul.addr %s81, 16
      %s86 = scalar_lea.hbm %s5, %s85
      %s88 = sshll.u32 [#allocation24], 4
      %s89 = int_to_ptr.vmem [resolvable:$true] %s88
      %91 = dma.hbm_to_vmem [thread:$0]  %s86, 128, %s89, [#allocation23]
    $region25: #{tpu_custom_call.1} parent=1 // pred_fallthru
      _
    // Predicated region
    $region26: #{tpu_custom_call.1} parent=1 // pred_check
      _
    $region27: #{tpu_custom_call.1} parent=1 // pred_check_branch
      %93 = sbr.rel (0) target = $region29
    $region28: #{tpu_custom_call.1} parent=1 // pred_region
      %s94 = sadd.s32 0, 2
      %s95 = smul.u32 8, %s94
      %s97 = ssub.s32 128, 128
      %98 = vsyncadd [#allocation26], %s97
      %s99 = smul.addr %s95, 16
      %s100 = scalar_lea.hbm %s6, %s99
      %s102 = sshll.u32 [#allocation25], 4
      %s103 = int_to_ptr.vmem [resolvable:$true] %s102
      %105 = dma.hbm_to_vmem [thread:$0]  %s100, 128, %s103, [#allocation26]
    $region29: #{tpu_custom_call.1} parent=1 // pred_fallthru
      _
    // Predicated region
    $region30: #{tpu_custom_call.1} parent=1 // pred_check
      _
    $region31: #{tpu_custom_call.1} parent=1 // pred_check_branch
      %107 = sbr.rel (0) target = $region33
    $region32: #{tpu_custom_call.1} parent=1 // pred_region
      %s109 = ssub.s32 16, 16
      %110 = vsyncadd [#allocation28], %s109
      %s112 = sshll.u32 %s7, 4
      %s113 = int_to_ptr.vmem [resolvable:$true] %s112
      %115 = dma.vmem_to_smem %s113, 16, [#allocation27], [#allocation28]
    $region33: #{tpu_custom_call.1} parent=1 // pred_fallthru
      _
    // Predicated region
    $region34: #{tpu_custom_call.1} parent=1 // pred_check
      _
    $region35: #{tpu_custom_call.1} parent=1 // pred_check_branch
      %117 = sbr.rel (0) target = $region37
    $region36: #{tpu_custom_call.1} parent=1 // pred_region
      %s119 = ssub.s32 256, 256
      %120 = vsyncadd [#allocation26], %s119
      %s122 = sshll.u32 [#allocation29], 4
      %s123 = int_to_ptr.vmem [resolvable:$true] %s122
      %125 = dma.hbm_to_vmem [thread:$0]  %s8, 256, %s123, [#allocation26]
    $region37: #{tpu_custom_call.1} parent=1 // pred_fallthru
      _
    // Predicated region
    $region38: #{tpu_custom_call.1} parent=1 // pred_check
      _
    $region39: #{tpu_custom_call.1} parent=1 // pred_check_branch
      %127 = sbr.rel (0) target = $region41
    $region40: #{tpu_custom_call.1} parent=1 // pred_region
      %128 = dma.done [#allocation16], 128
    $region41: #{tpu_custom_call.1} parent=1 // pred_fallthru
      _
    // Predicated region
    $region42: #{tpu_custom_call.1} parent=1 // pred_check
      _
    $region43: #{tpu_custom_call.1} parent=1 // pred_check_branch
      %130 = sbr.rel (0) target = $region45
    $region44: #{tpu_custom_call.1} parent=1 // pred_region
      %131 = dma.done [#allocation19], 128
    $region45: #{tpu_custom_call.1} parent=1 // pred_fallthru
      _
    // Predicated region
    $region46: #{tpu_custom_call.1} parent=1 // pred_check
      _
    $region47: #{tpu_custom_call.1} parent=1 // pred_check_branch
      %133 = sbr.rel (0) target = $region49
    $region48: #{tpu_custom_call.1} parent=1 // pred_region
      %134 = dma.done [#allocation19], 128
    $region49: #{tpu_custom_call.1} parent=1 // pred_fallthru
      _
    // Predicated region
    $region50: #{tpu_custom_call.1} parent=1 // pred_check
      _
    $region51: #{tpu_custom_call.1} parent=1 // pred_check_branch
      %136 = sbr.rel (0) target = $region53
    $region52: #{tpu_custom_call.1} parent=1 // pred_region
      %137 = dma.done [#allocation17], 16
    $region53: #{tpu_custom_call.1} parent=1 // pred_fallthru
      _
    // Predicated region
    $region54: #{tpu_custom_call.1} parent=1 // pred_check
      _
    $region55: #{tpu_custom_call.1} parent=1 // pred_check_branch
      %139 = sbr.rel (0) target = $region57
    $region56: #{tpu_custom_call.1} parent=1 // pred_region
      %140 = dma.done [#allocation23], 128
    $region57: #{tpu_custom_call.1} parent=1 // pred_fallthru
      _
    // Predicated region
    $region58: #{tpu_custom_call.1} parent=1 // pred_check
      _
    $region59: #{tpu_custom_call.1} parent=1 // pred_check_branch
      %142 = sbr.rel (0) target = $region61
    $region60: #{tpu_custom_call.1} parent=1 // pred_region
      %143 = dma.done [#allocation23], 128
    $region61: #{tpu_custom_call.1} parent=1 // pred_fallthru
      _
    // Predicated region
    $region62: #{tpu_custom_call.1} parent=1 // pred_check
      _
    $region63: #{tpu_custom_call.1} parent=1 // pred_check_branch
      %145 = sbr.rel (0) target = $region65
    $region64: #{tpu_custom_call.1} parent=1 // pred_region
      %146 = dma.done [#allocation26], 128
    $region65: #{tpu_custom_call.1} parent=1 // pred_fallthru
      _
    // Predicated region
    $region66: #{tpu_custom_call.1} parent=1 // pred_check
      _
    $region67: #{tpu_custom_call.1} parent=1 // pred_check_branch
      %148 = sbr.rel (0) target = $region69
    $region68: #{tpu_custom_call.1} parent=1 // pred_region
      %149 = dma.done [#allocation28], 16
    $region69: #{tpu_custom_call.1} parent=1 // pred_fallthru
      _
    // Predicated region
    $region70: #{tpu_custom_call.1} parent=1 // pred_check
      _
    $region71: #{tpu_custom_call.1} parent=1 // pred_check_branch
      %151 = sbr.rel (0) target = $region73
    $region72: #{tpu_custom_call.1} parent=1 // pred_region
      %152 = dma.done [#allocation26], 256
    $region73: #{tpu_custom_call.1} parent=1 // pred_fallthru
      _
    %153 = sfence
    %s154 = sadd.s32 0, 1
    %s155 = smul.u32 8, %s154
    %s156 = sadd.s32 0, 2
    %s157 = smul.u32 8, %s156
    %s158 = sadd.s32 0, 1
    %s159 = smul.u32 8, %s158
    %s160 = sadd.s32 0, 2
    %s161 = smul.u32 8, %s160
    %p162 = scmp.eq.s32.totalorder 0, 0
    // Predicated region
    $region74: #{tpu_custom_call.1} parent=1 // pred_check
      %p163 = pneg %p162
    $region75: #{tpu_custom_call.1} parent=1 // pred_check_branch
      %165 = sbr.rel (%p163) target = $region77
    $region76: #{tpu_custom_call.1} parent=1 // pred_region
      %166 = vst [vmem:[#allocation2] sm:$0x3] 0.0
      %167 = vst [vmem:[#allocation3] sm:$0x3] 0.0
      %168 = vst [vmem:[#allocation4] sm:$0x3] 0.0
      %169 = vst [vmem:[#allocation5] sm:$0x3] 0.0
      %170 = vst [vmem:[#allocation9] sm:$0x3] 0.0
      %171 = vst [vmem:[#allocation10] sm:$0x3] 0.0
      %172 = vst [vmem:[#allocation11] sm:$0x3] 0.0
      %173 = vst [vmem:[#allocation12] sm:$0x3] 0.0
      %174 = vst [vmem:[#allocation13] sm:$0x3] 0.0
      %175 = vst [vmem:[#allocation14] sm:$0x3] 0.0
      %176 = vst [vmem:[#allocation6] sm:$0x3] inf
      %177 = vst [vmem:[#allocation7] sm:$0x3] -inf
      %178 = vst [vmem:[#allocation8] sm:$0x3] -inf
    $region77: #{tpu_custom_call.1} parent=1 // pred_fallthru
      _
    %v179 = vld [vmem:[#allocation15] sm:$0xf]
    %v180 = vunpack.c.l.bf16 %v179
    %s181 = sld [smem:[#allocation21]]
    %v182 = vstv %s181
    %v183 = vmul.f32 %v180, %v182
    %v184 = vld [vmem:[#allocation18] sm:$0xf]
    %v185 = vunpack.c.l.bf16 %v184
    %s186 = sld [smem:[#allocation21 + $0x1]]
    %v187 = vstv %s186
    %v188 = vmul.f32 %v185, %v187
    %v189 = vadd.f32 %v183, %v188
    %v190 = vld [vmem:[#allocation20] sm:$0xf]
    %v191 = vunpack.c.l.bf16 %v190
    %s192 = sld [smem:[#allocation21 + $0x2]]
    %v193 = vstv %s192
    %v194 = vmul.f32 %v191, %v193
    %v195 = vadd.f32 %v189, %v194
    %s196 = sld [smem:[#allocation21 + $0x3]]
    %v197 = vstv %s196
    %v198 = vadd.f32 %v195, %v197
    %v199 = vmax.f32 %v198, 0.0
    %v200 = vand.u32 2147483647, %v198
    %v201 = vsub.f32 0.0, %v200
    %v202 = vmul.f32 %v201, 1.442695
    %v203 = vpow.pop %v202
    %v204 = vadd.f32 %v203, 1.0
    %v205 = vlog2.pop %v204
    %v206 = vmul.f32 %v205, 0.6931472
    %v207 = vadd.f32 %v199, %v206
    %v208 = vmin.f32 %v207, 100.0
    %v209 = vld [vmem:[#allocation2] sm:$0x3]
    %v211 = vrot.slane %v208, 2
    %v213 = vadd.f32 %v208, %v211
    %v214 = vrot.slane %v208, 4
    %v216 = vadd.f32 %v213, %v214
    %v217 = vrot.slane %v208, 6
    %v219 = vadd.f32 %v216, %v217
    %v220 = vadd.f32 %v209, %v219
    %221 = vst [vmem:[#allocation2] sm:$0x3] %v220
    %v222 = vld [vmem:[#allocation22] sm:$0xf]
    %v223 = vunpack.c.l.bf16 %v222
    %s224 = sld [smem:[#allocation27]]
    %v225 = vstv %s224
    %v226 = vmul.f32 %v223, %v225
    %v227 = vld [vmem:[#allocation24] sm:$0xf]
    %v228 = vunpack.c.l.bf16 %v227
    %s229 = sld [smem:[#allocation27 + $0x1]]
    %v230 = vstv %s229
    %v231 = vmul.f32 %v228, %v230
    %v232 = vadd.f32 %v226, %v231
    %v233 = vld [vmem:[#allocation25] sm:$0xf]
    %v234 = vunpack.c.l.bf16 %v233
    %s235 = sld [smem:[#allocation27 + $0x2]]
    %v236 = vstv %s235
    %v237 = vmul.f32 %v234, %v236
    %v238 = vadd.f32 %v232, %v237
    %s239 = sld [smem:[#allocation27 + $0x3]]
    %v240 = vstv %s239
    %v241 = vadd.f32 %v238, %v240
    %v242 = vmul.f32 %v241, 0.5
    %v243 = vtanh.pop %v242
    %v244 = vmul.f32 %v243, 0.5
    %v245 = vadd.f32 %v244, 0.5
    %v246 = vld [vmem:[#allocation3] sm:$0x3]
    %v247 = vmul.f32 %v245, %v198
    %v249 = vrot.slane %v247, 2
    %v251 = vadd.f32 %v247, %v249
    %v252 = vrot.slane %v247, 4
    %v254 = vadd.f32 %v251, %v252
    %v255 = vrot.slane %v247, 6
    %v257 = vadd.f32 %v254, %v255
    %v258 = vadd.f32 %v246, %v257
    %259 = vst [vmem:[#allocation3] sm:$0x3] %v258
    %v260 = vld [vmem:[#allocation29] sm:$0xff]
    %v261 = vld [vmem:[#allocation4] sm:$0x3]
    %v262 = vmul.f32 %v260, %v198
    %v264 = vrot.slane %v262, 2
    %v266 = vadd.f32 %v262, %v264
    %v267 = vrot.slane %v262, 4
    %v269 = vadd.f32 %v266, %v267
    %v270 = vrot.slane %v262, 6
    %v272 = vadd.f32 %v269, %v270
    %v273 = vadd.f32 %v261, %v272
    %274 = vst [vmem:[#allocation4] sm:$0x3] %v273
    %v275 = vld [vmem:[#allocation5] sm:$0x3]
    %v277 = vrot.slane %v198, 2
    %v279 = vadd.f32 %v198, %v277
    %v280 = vrot.slane %v198, 4
    %v282 = vadd.f32 %v279, %v280
    %v283 = vrot.slane %v198, 6
    %v285 = vadd.f32 %v282, %v283
    %v286 = vadd.f32 %v275, %v285
    %287 = vst [vmem:[#allocation5] sm:$0x3] %v286
    %v288 = vld [vmem:[#allocation6] sm:$0x3]
    %v290 = vrot.slane %v260, 2
    %v292 = vmin.f32 %v260, %v290
    %v293 = vrot.slane %v260, 4
    %v295 = vmin.f32 %v292, %v293
    %v296 = vrot.slane %v260, 6
    %v298 = vmin.f32 %v295, %v296
    %v299 = vmin.f32 %v288, %v298
    %300 = vst [vmem:[#allocation6] sm:$0x3] %v299
    %v301 = vld [vmem:[#allocation7] sm:$0x3]
    %v302 = vmax.f32 %v260, %v290
    %v303 = vmax.f32 %v302, %v293
    %v304 = vmax.f32 %v303, %v296
    %v305 = vmax.f32 %v301, %v304
    %306 = vst [vmem:[#allocation7] sm:$0x3] %v305
    %v307 = vld [vmem:[#allocation13] sm:$0x3]
    %v308 = vadd.f32 %v260, %v290
    %v309 = vadd.f32 %v308, %v293
    %v310 = vadd.f32 %v309, %v296
    %v311 = vadd.f32 %v307, %v310
    %312 = vst [vmem:[#allocation13] sm:$0x3] %v311
    %v313 = vld [vmem:[#allocation14] sm:$0x3]
    %v314 = vmul.f32 %v260, %v260
    %v316 = vrot.slane %v314, 2
    %v318 = vadd.f32 %v314, %v316
    %v319 = vrot.slane %v314, 4
    %v321 = vadd.f32 %v318, %v319
    %v322 = vrot.slane %v314, 6
    %v324 = vadd.f32 %v321, %v322
    %v325 = vadd.f32 %v313, %v324
    %326 = vst [vmem:[#allocation14] sm:$0x3] %v325
    %v327 = vld [vmem:[#allocation12] sm:$0x3]
    %vm328 = vcmp.gt.f32.partialorder %v260, 0.0
    %v329 = vlog2.pop %v260
    %v330 = vmul.f32 %v329, 0.6931472
    %v331 = vmul.f32 %v260, %v330
    %v332 = vsel %vm328, %v331, 0.0
    %v334 = vrot.slane %v332, 2
    %v336 = vadd.f32 %v332, %v334
    %v337 = vrot.slane %v332, 4
    %v339 = vadd.f32 %v336, %v337
    %v340 = vrot.slane %v332, 6
    %v342 = vadd.f32 %v339, %v340
    %v343 = vadd.f32 %v327, %v342
    %344 = vst [vmem:[#allocation12] sm:$0x3] %v343
    %v345 = vld [vmem:[#allocation8] sm:$0x3]
    %v346 = vmax.f32 %v198, %v277
    %v347 = vmax.f32 %v346, %v280
    %v348 = vmax.f32 %v347, %v283
    %v349 = vmax.f32 %v345, %v348
    %v350 = vsub.f32 %v345, %v349
    %v351 = vmul.f32 %v350, 1.442695
    %v352 = vpow.pop %v351
    %v353 = vld [vmem:[#allocation9] sm:$0x3]
    %v354 = vmul.f32 %v353, %v352
    %v355 = vld [vmem:[#allocation10] sm:$0x3]
    %v356 = vmul.f32 %v355, %v352
    %v357 = vld [vmem:[#allocation11] sm:$0x3]
    %v358 = vmul.f32 %v352, %v352
    %v359 = vmul.f32 %v357, %v358
    %v360 = vsub.f32 %v198, %v349
    %v361 = vmul.f32 %v360, 1.442695
    %v362 = vpow.pop %v361
    %v363 = vadd.f32 %v354, %v362
    %v364 = vmul.f32 %v362, %v260
    %v365 = vadd.f32 %v356, %v364
    %v366 = vmul.f32 %v362, %v362
    %v367 = vadd.f32 %v359, %v366
    %v368 = vsub.f32 %v277, %v349
    %v369 = vmul.f32 %v368, 1.442695
    %v370 = vpow.pop %v369
    %v371 = vadd.f32 %v363, %v370
    %v372 = vmul.f32 %v370, %v290
    %v373 = vadd.f32 %v365, %v372
    %v374 = vmul.f32 %v370, %v370
    %v375 = vadd.f32 %v367, %v374
    %v376 = vsub.f32 %v280, %v349
    %v377 = vmul.f32 %v376, 1.442695
    %v378 = vpow.pop %v377
    %v379 = vadd.f32 %v371, %v378
    %v380 = vmul.f32 %v378, %v293
    %v381 = vadd.f32 %v373, %v380
    %v382 = vmul.f32 %v378, %v378
    %v383 = vadd.f32 %v375, %v382
    %v384 = vsub.f32 %v283, %v349
    %v385 = vmul.f32 %v384, 1.442695
    %v386 = vpow.pop %v385
    %v387 = vadd.f32 %v379, %v386
    %v388 = vmul.f32 %v386, %v296
    %v389 = vadd.f32 %v381, %v388
    %v390 = vmul.f32 %v386, %v386
    %v391 = vadd.f32 %v383, %v390
    %392 = vst [vmem:[#allocation8] sm:$0x3] %v349
    %393 = vst [vmem:[#allocation9] sm:$0x3] %v387
    %394 = vst [vmem:[#allocation10] sm:$0x3] %v389
    %395 = vst [vmem:[#allocation11] sm:$0x3] %v391
    %v396 = vld [vmem:[#allocation15 + $0x4] sm:$0xf]
    %v397 = vunpack.c.l.bf16 %v396
    %s398 = sld [smem:[#allocation21]]
    %v399 = vstv %s398
    %v400 = vmul.f32 %v397, %v399
    %v401 = vld [vmem:[#allocation18 + $0x4] sm:$0xf]
    %v402 = vunpack.c.l.bf16 %v401
    %s403 = sld [smem:[#allocation21 + $0x1]]
    %v404 = vstv %s403
    %v405 = vmul.f32 %v402, %v404
    %v406 = vadd.f32 %v400, %v405
    %v407 = vld [vmem:[#allocation20 + $0x4] sm:$0xf]
    %v408 = vunpack.c.l.bf16 %v407
    %s409 = sld [smem:[#allocation21 + $0x2]]
    %v410 = vstv %s409
    %v411 = vmul.f32 %v408, %v410
    %v412 = vadd.f32 %v406, %v411
    %s413 = sld [smem:[#allocation21 + $0x3]]
    %v414 = vstv %s413
    %v415 = vadd.f32 %v412, %v414
    %v416 = vmax.f32 %v415, 0.0
    %v417 = vand.u32 2147483647, %v415
    %v418 = vsub.f32 0.0, %v417
    %v419 = vmul.f32 %v418, 1.442695
    %v420 = vpow.pop %v419
    %v421 = vadd.f32 %v420, 1.0
    %v422 = vlog2.pop %v421
    %v423 = vmul.f32 %v422, 0.6931472
    %v424 = vadd.f32 %v416, %v423
    %v425 = vmin.f32 %v424, 100.0
    %v426 = vld [vmem:[#allocation2] sm:$0x3]
    %v428 = vrot.slane %v425, 2
    %v430 = vadd.f32 %v425, %v428
    %v431 = vrot.slane %v425, 4
    %v433 = vadd.f32 %v430, %v431
    %v434 = vrot.slane %v425, 6
    %v436 = vadd.f32 %v433, %v434
    %v437 = vadd.f32 %v426, %v436
    %438 = vst [vmem:[#allocation2] sm:$0x3] %v437
    %v439 = vld [vmem:[#allocation22 + $0x4] sm:$0xf]
    %v440 = vunpack.c.l.bf16 %v439
    %s441 = sld [smem:[#allocation27]]
    %v442 = vstv %s441
    %v443 = vmul.f32 %v440, %v442
    %v444 = vld [vmem:[#allocation24 + $0x4] sm:$0xf]
    %v445 = vunpack.c.l.bf16 %v444
    %s446 = sld [smem:[#allocation27 + $0x1]]
    %v447 = vstv %s446
    %v448 = vmul.f32 %v445, %v447
    %v449 = vadd.f32 %v443, %v448
    %v450 = vld [vmem:[#allocation25 + $0x4] sm:$0xf]
    %v451 = vunpack.c.l.bf16 %v450
    %s452 = sld [smem:[#allocation27 + $0x2]]
    %v453 = vstv %s452
    %v454 = vmul.f32 %v451, %v453
    %v455 = vadd.f32 %v449, %v454
    %s456 = sld [smem:[#allocation27 + $0x3]]
    %v457 = vstv %s456
    %v458 = vadd.f32 %v455, %v457
    %v459 = vmul.f32 %v458, 0.5
    %v460 = vtanh.pop %v459
    %v461 = vmul.f32 %v460, 0.5
    %v462 = vadd.f32 %v461, 0.5
    %v463 = vld [vmem:[#allocation3] sm:$0x3]
    %v464 = vmul.f32 %v462, %v415
    %v466 = vrot.slane %v464, 2
    %v468 = vadd.f32 %v464, %v466
    %v469 = vrot.slane %v464, 4
    %v471 = vadd.f32 %v468, %v469
    %v472 = vrot.slane %v464, 6
    %v474 = vadd.f32 %v471, %v472
    %v475 = vadd.f32 %v463, %v474
    %476 = vst [vmem:[#allocation3] sm:$0x3] %v475
    %v477 = vld [vmem:[#allocation29 + $0x8] sm:$0xff]
    %v478 = vld [vmem:[#allocation4] sm:$0x3]
    %v479 = vmul.f32 %v477, %v415
    %v481 = vrot.slane %v479, 2
    %v483 = vadd.f32 %v479, %v481
    %v484 = vrot.slane %v479, 4
    %v486 = vadd.f32 %v483, %v484
    %v487 = vrot.slane %v479, 6
    %v489 = vadd.f32 %v486, %v487
    %v490 = vadd.f32 %v478, %v489
    %491 = vst [vmem:[#allocation4] sm:$0x3] %v490
    %v492 = vld [vmem:[#allocation5] sm:$0x3]
    %v494 = vrot.slane %v415, 2
    %v496 = vadd.f32 %v415, %v494
    %v497 = vrot.slane %v415, 4
    %v499 = vadd.f32 %v496, %v497
    %v500 = vrot.slane %v415, 6
    %v502 = vadd.f32 %v499, %v500
    %v503 = vadd.f32 %v492, %v502
    %504 = vst [vmem:[#allocation5] sm:$0x3] %v503
    %v505 = vld [vmem:[#allocation6] sm:$0x3]
    %v507 = vrot.slane %v477, 2
    %v509 = vmin.f32 %v477, %v507
    %v510 = vrot.slane %v477, 4
    %v512 = vmin.f32 %v509, %v510
    %v513 = vrot.slane %v477, 6
    %v515 = vmin.f32 %v512, %v513
    %v516 = vmin.f32 %v505, %v515
    %517 = vst [vmem:[#allocation6] sm:$0x3] %v516
    %v518 = vld [vmem:[#allocation7] sm:$0x3]
    %v519 = vmax.f32 %v477, %v507
    %v520 = vmax.f32 %v519, %v510
    %v521 = vmax.f32 %v520, %v513
    %v522 = vmax.f32 %v518, %v521
    %523 = vst [vmem:[#allocation7] sm:$0x3] %v522
    %v524 = vld [vmem:[#allocation13] sm:$0x3]
    %v525 = vadd.f32 %v477, %v507
    %v526 = vadd.f32 %v525, %v510
    %v527 = vadd.f32 %v526, %v513
    %v528 = vadd.f32 %v524, %v527
    %529 = vst [vmem:[#allocation13] sm:$0x3] %v528
    %v530 = vld [vmem:[#allocation14] sm:$0x3]
    %v531 = vmul.f32 %v477, %v477
    %v533 = vrot.slane %v531, 2
    %v535 = vadd.f32 %v531, %v533
    %v536 = vrot.slane %v531, 4
    %v538 = vadd.f32 %v535, %v536
    %v539 = vrot.slane %v531, 6
    %v541 = vadd.f32 %v538, %v539
    %v542 = vadd.f32 %v530, %v541
    %543 = vst [vmem:[#allocation14] sm:$0x3] %v542
    %v544 = vld [vmem:[#allocation12] sm:$0x3]
    %vm545 = vcmp.gt.f32.partialorder %v477, 0.0
    %v546 = vlog2.pop %v477
    %v547 = vmul.f32 %v546, 0.6931472
    %v548 = vmul.f32 %v477, %v547
    %v549 = vsel %vm545, %v548, 0.0
    %v551 = vrot.slane %v549, 2
    %v553 = vadd.f32 %v549, %v551
    %v554 = vrot.slane %v549, 4
    %v556 = vadd.f32 %v553, %v554
    %v557 = vrot.slane %v549, 6
    %v559 = vadd.f32 %v556, %v557
    %v560 = vadd.f32 %v544, %v559
    %561 = vst [vmem:[#allocation12] sm:$0x3] %v560
    %v562 = vld [vmem:[#allocation8] sm:$0x3]
    %v563 = vmax.f32 %v415, %v494
    %v564 = vmax.f32 %v563, %v497
    %v565 = vmax.f32 %v564, %v500
    %v566 = vmax.f32 %v562, %v565
    %v567 = vsub.f32 %v562, %v566
    %v568 = vmul.f32 %v567, 1.442695
    %v569 = vpow.pop %v568
    %v570 = vld [vmem:[#allocation9] sm:$0x3]
    %v571 = vmul.f32 %v570, %v569
    %v572 = vld [vmem:[#allocation10] sm:$0x3]
    %v573 = vmul.f32 %v572, %v569
    %v574 = vld [vmem:[#allocation11] sm:$0x3]
    %v575 = vmul.f32 %v569, %v569
    %v576 = vmul.f32 %v574, %v575
    %v577 = vsub.f32 %v415, %v566
    %v578 = vmul.f32 %v577, 1.442695
    %v579 = vpow.pop %v578
    %v580 = vadd.f32 %v571, %v579
    %v581 = vmul.f32 %v579, %v477
    %v582 = vadd.f32 %v573, %v581
    %v583 = vmul.f32 %v579, %v579
    %v584 = vadd.f32 %v576, %v583
    %v585 = vsub.f32 %v494, %v566
    %v586 = vmul.f32 %v585, 1.442695
    %v587 = vpow.pop %v586
    %v588 = vadd.f32 %v580, %v587
    %v589 = vmul.f32 %v587, %v507
    %v590 = vadd.f32 %v582, %v589
    %v591 = vmul.f32 %v587, %v587
    %v592 = vadd.f32 %v584, %v591
    %v593 = vsub.f32 %v497, %v566
    %v594 = vmul.f32 %v593, 1.442695
    %v595 = vpow.pop %v594
    %v596 = vadd.f32 %v588, %v595
    %v597 = vmul.f32 %v595, %v510
    %v598 = vadd.f32 %v590, %v597
    %v599 = vmul.f32 %v595, %v595
    %v600 = vadd.f32 %v592, %v599
    %v601 = vsub.f32 %v500, %v566
    %v602 = vmul.f32 %v601, 1.442695
    %v603 = vpow.pop %v602
    %v604 = vadd.f32 %v596, %v603
    %v605 = vmul.f32 %v603, %v513
    %v606 = vadd.f32 %v598, %v605
    %v607 = vmul.f32 %v603, %v603
    %v608 = vadd.f32 %v600, %v607
    %609 = vst [vmem:[#allocation8] sm:$0x3] %v566
    %610 = vst [vmem:[#allocation9] sm:$0x3] %v604
    %611 = vst [vmem:[#allocation10] sm:$0x3] %v606
    %612 = vst [vmem:[#allocation11] sm:$0x3] %v608
    // Predicated region
    $region78: #{tpu_custom_call.1} parent=1 // pred_check
      %p613 = pneg %p162
    $region79: #{tpu_custom_call.1} parent=1 // pred_check_branch
      %615 = sbr.rel (%p613) target = $region81
    $region80: #{tpu_custom_call.1} parent=1 // pred_region
      %v616 = vld [vmem:[#allocation2] sm:$0x3]
      %vm617 = vcmask 1041408
      %v618 = vsel %vm617, %v616, 0.0
      %619 = vadd.xlane.f32.xlu0 %v618
      %v620 = vpop.xlane.xlu0 %619
      %v621 = vld [vmem:[#allocation3] sm:$0x3]
      %v622 = vsel %vm617, %v621, 0.0
      %623 = vadd.xlane.f32.xlu0 %v622
      %v624 = vpop.xlane.xlu0 %623
      %v625 = vsub.f32 %v620, %v624
      %v626 = vmul.f32 %v625, 0.00048828125
      %v627 = vadd.f32 %v626, 0.0
      %v628 = vld [vmem:[#allocation4] sm:$0x3]
      %v629 = vsel %vm617, %v628, 0.0
      %630 = vadd.xlane.f32.xlu0 %v629
      %v631 = vpop.xlane.xlu0 %630
      %v632 = vsub.f32 %v620, %v631
      %v633 = vmul.f32 %v632, 0.00048828125
      %v634 = vadd.f32 %v627, %v633
      %v635 = vld [vmem:[#allocation5] sm:$0x3]
      %v636 = vsel %vm617, %v635, 0.0
      %637 = vadd.xlane.f32.xlu0 %v636
      %v638 = vpop.xlane.xlu0 %637
      %v639 = vld [vmem:[#allocation6] sm:$0x3]
      %v640 = vsel %vm617, %v639, inf
      %641 = vmin.xlane.f32.xlu0 %v640
      %v642 = vpop.xlane.xlu0 %641
      %v643 = vld [vmem:[#allocation7] sm:$0x3]
      %v644 = vsel %vm617, %v643, -inf
      %645 = vmax.xlane.f32.xlu0 %v644
      %v646 = vpop.xlane.xlu0 %645
      %v647 = vld [vmem:[#allocation8] sm:$0x3]
      %v648 = vsel %vm617, %v647, -inf
      %649 = vmax.xlane.f32.xlu0 %v648
      %v650 = vpop.xlane.xlu0 %649
      %v651 = vsub.f32 %v647, %v650
      %v652 = vmul.f32 %v651, 1.442695
      %v653 = vpow.pop %v652
      %v654 = vld [vmem:[#allocation9] sm:$0x3]
      %v655 = vmul.f32 %v654, %v653
      %v656 = vsel %vm617, %v655, 0.0
      %657 = vadd.xlane.f32.xlu0 %v656
      %v658 = vpop.xlane.xlu0 %657
      %v659 = vld [vmem:[#allocation10] sm:$0x3]
      %v660 = vmul.f32 %v659, %v653
      %v661 = vsel %vm617, %v660, 0.0
      %662 = vadd.xlane.f32.xlu0 %v661
      %v663 = vpop.xlane.xlu0 %662
      %v664 = vld [vmem:[#allocation11] sm:$0x3]
      %v665 = vmul.f32 %v653, %v653
      %v666 = vmul.f32 %v664, %v665
      %v667 = vsel %vm617, %v666, 0.0
      %668 = vadd.xlane.f32.xlu0 %v667
      %v669 = vpop.xlane.xlu0 %668
      %v670 = vlog2.pop %v658
      %v671 = vmul.f32 %v670, 0.6931472
      %v672 = vadd.f32 %v650, %v671
      %v673 = vld [vmem:[#allocation12] sm:$0x3]
      %v674 = vsel %vm617, %v673, 0.0
      %675 = vadd.xlane.f32.xlu0 %v674
      %v676 = vpop.xlane.xlu0 %675
      %v677 = vsub.f32 %v676, %v631
      %v678 = vld [vmem:[#allocation13] sm:$0x3]
      %v679 = vsel %vm617, %v678, 0.0
      %680 = vadd.xlane.f32.xlu0 %v679
      %v681 = vpop.xlane.xlu0 %680
      %v682 = vmul.f32 %v681, %v672
      %v683 = vadd.f32 %v677, %v682
      %v684 = vrcp.pop %v658
      %v685 = vmul.f32 %v663, %v684
      %v686 = vrsqrt.pop %v669
      %v687 = vmul.f32 %v669, %v686
      %vm688 = vcmp.eq.f32.partialorder %v669, inf
      %v689 = vsel %vm688, %v669, %v687
      %vm690 = vcmp.eq.f32.partialorder %v669, 0.0
      %v691 = vand.u32 %v669, 2147483648
      %v692 = vsel %vm690, %v691, %v689
      %v693 = vmul.f32 %v692, %v684
      %v694 = vld [vmem:[#allocation14] sm:$0x3]
      %v695 = vsel %vm617, %v694, 0.0
      %696 = vadd.xlane.f32.xlu0 %v695
      %v697 = vpop.xlane.xlu0 %696
      %v698 = vrsqrt.pop %v697
      %v699 = vmul.f32 %v697, %v698
      %vm700 = vcmp.eq.f32.partialorder %v697, inf
      %v701 = vsel %vm700, %v697, %v699
      %vm702 = vcmp.eq.f32.partialorder %v697, 0.0
      %v703 = vand.u32 %v697, 2147483648
      %v704 = vsel %vm702, %v703, %v701
      %v705 = vmax.f32 %v693, 1e-08
      %v706 = vmax.f32 %v704, 1e-08
      %v707 = vmul.f32 %v705, %v706
      %v708 = vrcp.pop %v707
      %v709 = vmul.f32 %v685, %v708
      %v710 = vmul.f32 %v642, %v638
      %v711 = vsub.f32 %v631, %v710
      %v712 = vsub.f32 %v646, %v642
      %v713 = vrcp.pop %v712
      %v714 = vmul.f32 %v711, %v713
      %v715 = vsub.f32 %v620, %v714
      %v716 = vmul.f32 %v683, 0.25
      %v717 = vadd.f32 %v634, %v716
      %v718 = vmul.f32 %v715, 0.00014648438
      %v719 = vadd.f32 %v717, %v718
      %v720 = vsub.f32 1.0, %v709
      %v721 = vmul.f32 %v720, 0.1
      %v722 = vadd.f32 %v719, %v721
      %vm723 = vcmask 1024
      %724 = vst.msk [vmem:[%s9] sm:$0x3] %vm723, %v722
    $region81: #{tpu_custom_call.1} parent=1 // pred_fallthru
      _
    // Predicated region
    $region82: #{tpu_custom_call.1} parent=1 // pred_check
      _
    $region83: #{tpu_custom_call.1} parent=1 // pred_check_branch
      %726 = sbr.rel (0) target = $region85
    $region84: #{tpu_custom_call.1} parent=1 // pred_region
      _
    $region85: #{tpu_custom_call.1} parent=1 // pred_fallthru
      _
    // Predicated region
    $region86: #{tpu_custom_call.1} parent=1 // pred_check
      _
    $region87: #{tpu_custom_call.1} parent=1 // pred_check_branch
      %728 = sbr.rel (0) target = $region89
    $region88: #{tpu_custom_call.1} parent=1 // pred_region
      _
    $region89: #{tpu_custom_call.1} parent=1 // pred_fallthru
      _
    %729 = vsyncpa [#allocation16], 1
    %730 = vsyncpa [#allocation19], 1
    %731 = vsyncpa [#allocation23], 1
    %732 = vsyncpa [#allocation26], 1
    %733 = vsyncpa [#allocation17], 1
    %734 = vsyncpa [#allocation28], 1

</llo_original>
